<compile_context>
chip_gen: v7x
topology: tpu7x:2x2x1
jax: 0.10.0
libtpu: 0.0.40
codegen_flags: <defaults>
</compile_context>

<pallas_src>
import functools

import jax
import jax.numpy as jnp
from jax.experimental import pallas as pl
from jax.experimental.pallas import tpu as pltpu

LANE = 128
_VMEM = pl.BlockSpec(memory_space=pltpu.MemorySpace.VMEM)


# ---------------------------------------------------------------------------
# Layout: column offsets of every layer inside the packed weight/bias slabs.
# ---------------------------------------------------------------------------
def make_layout(input_size, latent_dim, clf_hidden, num_classes,
                enc_hidden=(48, 40, 32, 24), dec_hidden=(24, 32, 40, 48)):
    enc_dims = [input_size, *enc_hidden, latent_dim]
    dec_dims = [latent_dim, *dec_hidden, input_size]
    assert max(max(enc_dims), max(dec_dims), clf_hidden, num_classes) <= LANE, (
        "single-VMEM-slab design assumes every layer dim fits one 128-lane block; "
        "real-size dims need grid-tiled matmuls instead")
    off = 0
    enc_offs = []
    for _ in range(len(enc_dims) - 1):
        enc_offs.append(off)
        off += LANE
    head_off = off              # mu | log_var | clf layer-1, each 128 lanes wide
    off += 3 * LANE
    dec_offs = []
    for _ in range(len(dec_dims) - 1):
        dec_offs.append(off)
        off += LANE
    clf2_off = off
    off += LANE
    return dict(input_size=input_size, latent_dim=latent_dim,
                clf_hidden=clf_hidden, num_classes=num_classes,
                enc_dims=enc_dims, dec_dims=dec_dims,
                enc_offs=tuple(enc_offs), head_off=head_off,
                dec_offs=tuple(dec_offs), clf2_off=clf2_off, total_cols=off)


# ---------------------------------------------------------------------------
# Single fused Pallas kernel: whole VAEWithClassifier forward pass.
# ---------------------------------------------------------------------------
def _fused_vae_kernel(in_ref, w_ref, b_ref, out_ref, *,
                      enc_offs, head_off, dec_offs, clf2_off):
    def dense(h, col, width, relu):
        w = w_ref[:, col:col + width]          # (128, width) bf16, lane-aligned static view
        b = b_ref[:, col:col + width]          # (1, width)  f32, broadcasts over batch rows
        y = jnp.dot(h.astype(jnp.bfloat16), w,
                    preferred_element_type=jnp.float32) + b
        return jnp.maximum(y, 0.0) if relu else y

    xin = in_ref[...]
    h = xin[:, 0:LANE]                 # x, zero-padded to 128 lanes
    eps = xin[:, LANE:2 * LANE]        # eps, zero-padded to 128 lanes

    # --- encoder: Linear + ReLU x5 (ReLU after every layer, incl. the last) ---
    for col in enc_offs:
        h = dense(h, col, LANE, relu=True)
    encoded = h                        # lanes >= latent_dim are exactly 0

    # --- fused head: mu | log_var | classifier layer-1, one matmul ---
    heads = dense(encoded, head_off, 3 * LANE, relu=False)
    mu = heads[:, 0:LANE]
    log_var = jnp.clip(heads[:, LANE:2 * LANE], -5.0, 5.0)
    c1 = jnp.maximum(heads[:, 2 * LANE:3 * LANE], 0.0)

    # --- reparameterize (f32 element-wise): z = mu + eps * exp(0.5 * log_var) ---
    z = mu + eps * jnp.exp(0.5 * log_var)

    # --- decoder: Linear + ReLU x4, then final Linear (no ReLU) ---
    h = z
    for i, col in enumerate(dec_offs):
        h = dense(h, col, LANE, relu=(i < len(dec_offs) - 1))
    decoded = h

    # --- classifier layer 2 ---
    logits = dense(c1, clf2_off, LANE, relu=False)

    # --- lane-dense output slab: 5 unmasked 128-lane-aligned stores, 1 DMA ---
    out_ref[:, 0:LANE] = encoded
    out_ref[:, LANE:2 * LANE] = decoded
    out_ref[:, 2 * LANE:3 * LANE] = mu
    out_ref[:, 3 * LANE:4 * LANE] = log_var
    out_ref[:, 4 * LANE:5 * LANE] = logits


# ---------------------------------------------------------------------------
# Jitted wrapper: one pallas_call for the whole forward pass.
# ---------------------------------------------------------------------------
def make_forward(layout):
    input_size = layout["input_size"]
    latent = layout["latent_dim"]
    num_classes = layout["num_classes"]
    total = layout["total_cols"]

    kernel = functools.partial(
        _fused_vae_kernel,
        enc_offs=layout["enc_offs"], head_off=layout["head_off"],
        dec_offs=layout["dec_offs"], clf2_off=layout["clf2_off"])

    @jax.jit
    def forward(params, x, eps):
        batch = x.shape[0]
        # Pack x and eps into one lane-aligned (batch, 256) input slab.
        in_slab = jnp.zeros((batch, 2 * LANE), jnp.float32)
        in_slab = in_slab.at[:, :input_size].set(x)
        in_slab = in_slab.at[:, LANE:LANE + latent].set(eps)

        cost = pl.CostEstimate(
            flops=2 * batch * LANE * total,          # every output lane = one K=128 matmul col
            transcendentals=batch * LANE,            # exp in reparameterize
            bytes_accessed=(in_slab.size * 4 + params["w_slab"].size * 2
                            + params["b_slab"].size * 4 + batch * 5 * LANE * 4))

        out = pl.pallas_call(
            kernel,
            out_shape=jax.ShapeDtypeStruct((batch, 5 * LANE), jnp.float32),
            in_specs=[_VMEM, _VMEM, _VMEM],
            out_specs=_VMEM,
            cost_estimate=cost,
        )(in_slab, params["w_slab"], params["b_slab"])

        encoded = out[:, 0:latent]
        decoded = out[:, LANE:LANE + input_size]
        mu = out[:, 2 * LANE:2 * LANE + latent]
        log_var = out[:, 3 * LANE:3 * LANE + latent]
        logits = out[:, 4 * LANE:4 * LANE + num_classes]
        return encoded, decoded, mu, log_var, logits

    return forward


# ---------------------------------------------------------------------------
# Parameter construction: all layers packed into two lane-aligned slabs.
# ---------------------------------------------------------------------------
def _make_linear(key, in_dim, out_dim):
    kw, kb = jax.random.split(key)
    bound = 1.0 / float(in_dim) ** 0.5
    w = jax.random.uniform(kw, (in_dim, out_dim), jnp.float32, -bound, bound)
    b = jax.random.uniform(kb, (out_dim,), jnp.float32, -bound, bound)
    return w, b


def build_params(key, layout):
    total = layout["total_cols"]
    w_slab = jnp.zeros((LANE, total), jnp.float32)
    b_slab = jnp.zeros((1, total), jnp.float32)

    def place(slabs, k, in_dim, out_dim, col):
        ws, bs = slabs
        w, b = _make_linear(k, in_dim, out_dim)
        ws = ws.at[:in_dim, col:col + out_dim].set(w)
        bs = bs.at[0, col:col + out_dim].set(b)
        return ws, bs

    enc_dims, dec_dims = layout["enc_dims"], layout["dec_dims"]
    lat, head_off = layout["latent_dim"], layout["head_off"]
    n_keys = (len(enc_dims) - 1) + (len(dec_dims) - 1) + 4
    keys = list(jax.random.split(key, n_keys))

    slabs = (w_slab, b_slab)
    for i, col in enumerate(layout["enc_offs"]):
        slabs = place(slabs, keys.pop(0), enc_dims[i], enc_dims[i + 1], col)
    slabs = place(slabs, keys.pop(0), lat, lat, head_off)                        # mu
    slabs = place(slabs, keys.pop(0), lat, lat, head_off + LANE)                 # log_var
    slabs = place(slabs, keys.pop(0), lat, layout["clf_hidden"], head_off + 2 * LANE)  # clf L1
    for i, col in enumerate(layout["dec_offs"]):
        slabs = place(slabs, keys.pop(0), dec_dims[i], dec_dims[i + 1], col)
    slabs = place(slabs, keys.pop(0), layout["clf_hidden"], layout["num_classes"],
                  layout["clf2_off"])                                            # clf L2
    w_slab, b_slab = slabs
    return dict(w_slab=w_slab.astype(jnp.bfloat16), b_slab=b_slab)


# ---------------------------------------------------------------------------
# Pure-JAX reference (same slabs / same bf16 dot inputs) for a tolerance check.
# ---------------------------------------------------------------------------
def reference_forward(params, x, eps, layout):
    w, b = params["w_slab"], params["b_slab"]
    input_size, latent = layout["input_size"], layout["latent_dim"]

    def dense(h, col, width, relu):
        y = jnp.dot(h.astype(jnp.bfloat16), w[:, col:col + width],
                    preferred_element_type=jnp.float32) + b[:, col:col + width]
        return jnp.maximum(y, 0.0) if relu else y

    batch = x.shape[0]
    h = jnp.zeros((batch, LANE), jnp.float32).at[:, :input_size].set(x)
    eps_p = jnp.zeros((batch, LANE), jnp.float32).at[:, :latent].set(eps)
    for col in layout["enc_offs"]:
        h = dense(h, col, LANE, True)
    encoded = h
    heads = dense(encoded, layout["head_off"], 3 * LANE, False)
    mu = heads[:, 0:LANE]
    log_var = jnp.clip(heads[:, LANE:2 * LANE], -5.0, 5.0)
    c1 = jnp.maximum(heads[:, 2 * LANE:3 * LANE], 0.0)
    h = mu + eps_p * jnp.exp(0.5 * log_var)
    for i, col in enumerate(layout["dec_offs"]):
        h = dense(h, col, LANE, i < len(layout["dec_offs"]) - 1)
    decoded = h
    logits = dense(c1, layout["clf2_off"], LANE, False)
    return (encoded[:, :latent], decoded[:, :input_size], mu[:, :latent],
            log_var[:, :latent], logits[:, :layout["num_classes"]])


if __name__ == "__main__":
    INPUT_SIZE = 64     # scaled-down analogue of the original input_size
    LATENT_DIM = 16     # scaled-down analogue of latent_dim=256
    NUM_CLASSES = 10
    CLF_HIDDEN = 128    # matches the original classifier hidden width exactly
    BATCH = 2

    layout = make_layout(INPUT_SIZE, LATENT_DIM, CLF_HIDDEN, NUM_CLASSES)
    forward = make_forward(layout)

    root = jax.random.PRNGKey(0)
    k_params, k_x, k_eps = jax.random.split(root, 3)
    params = build_params(k_params, layout)
    x = jax.random.normal(k_x, (BATCH, INPUT_SIZE), jnp.float32)
    eps = jax.random.normal(k_eps, (BATCH, LATENT_DIM), jnp.float32)

    outs = forward(params, x, eps)
    jax.block_until_ready(outs)
    encoded, decoded, mu, log_var, logits = outs

    assert encoded.shape == (BATCH, LATENT_DIM)
    assert decoded.shape == (BATCH, INPUT_SIZE)
    assert mu.shape == (BATCH, LATENT_DIM)
    assert log_var.shape == (BATCH, LATENT_DIM)
    assert logits.shape == (BATCH, NUM_CLASSES)
    for t in outs:
        assert bool(jnp.all(jnp.isfinite(t)))

    ref = reference_forward(params, x, eps, layout)
    names = ("encoded", "decoded", "mu", "log_var", "logits")
    for got, want, name in zip(outs, ref, names):
        assert bool(jnp.allclose(got, want, atol=1e-2, rtol=1e-2)), name

    print("KERNEL_OK")
</pallas_src>

<mosaic_0001>
module attributes {stable_mosaic.version = 11 : i64} {
  func.func @_fused_vae_kernel(%arg0: memref<2x256xf32, #tpu.memory_space<vmem>>, %arg1: memref<128x1792xbf16, #tpu.memory_space<vmem>>, %arg2: memref<1x1792xf32, #tpu.memory_space<vmem>>, %arg3: memref<2x640xf32, #tpu.memory_space<vmem>>) attributes {dimension_semantics = [], scalar_prefetch = 0 : i64, scratch_operands = 0 : i64, tpu.core_type = #tpu.core_type<tc>} {
    %c0 = arith.constant 0 : index
    %c0_0 = arith.constant 0 : index
    %0 = vector.load %arg0[%c0, %c0_0] : memref<2x256xf32, #tpu.memory_space<vmem>>, vector<2x256xf32>
    %1 = vector.extract_strided_slice %0 {offsets = [0, 0], sizes = [2, 128], strides = [1, 1]} : vector<2x256xf32> to vector<2x128xf32>
    %2 = vector.extract_strided_slice %0 {offsets = [0, 128], sizes = [2, 128], strides = [1, 1]} : vector<2x256xf32> to vector<2x128xf32>
    %c0_1 = arith.constant 0 : index
    %c0_2 = arith.constant 0 : index
    %3 = vector.load %arg1[%c0_1, %c0_2] : memref<128x1792xbf16, #tpu.memory_space<vmem>>, vector<128x128xbf16>
    %c0_3 = arith.constant 0 : index
    %c0_4 = arith.constant 0 : index
    %4 = vector.load %arg2[%c0_3, %c0_4] : memref<1x1792xf32, #tpu.memory_space<vmem>>, vector<1x128xf32>
    %5 = arith.truncf %1 : vector<2x128xf32> to vector<2x128xbf16>
    %cst = arith.constant dense<0.000000e+00> : vector<2x128xf32>
    %6 = tpu.matmul %5, %3, %cst {dimension_numbers = #tpu.dot_dimension_numbers<[1], [0], [0], [1], [0, 0, 1, 1], [], []>} : vector<2x128xbf16>, vector<128x128xbf16>, vector<2x128xf32> -> vector<2x128xf32>
    %7 = vector.broadcast %4 : vector<1x128xf32> to vector<2x128xf32>
    %8 = arith.addf %6, %7 : vector<2x128xf32>
    %cst_5 = arith.constant 0.000000e+00 : f32
    %9 = vector.broadcast %cst_5 : f32 to vector<2x128xf32>
    %10 = arith.maximumf %8, %9 : vector<2x128xf32>
    %c0_6 = arith.constant 0 : index
    %c128 = arith.constant 128 : index
    %11 = vector.load %arg1[%c0_6, %c128] : memref<128x1792xbf16, #tpu.memory_space<vmem>>, vector<128x128xbf16>
    %c0_7 = arith.constant 0 : index
    %c128_8 = arith.constant 128 : index
    %12 = vector.load %arg2[%c0_7, %c128_8] : memref<1x1792xf32, #tpu.memory_space<vmem>>, vector<1x128xf32>
    %13 = arith.truncf %10 : vector<2x128xf32> to vector<2x128xbf16>
    %cst_9 = arith.constant dense<0.000000e+00> : vector<2x128xf32>
    %14 = tpu.matmul %13, %11, %cst_9 {dimension_numbers = #tpu.dot_dimension_numbers<[1], [0], [0], [1], [0, 0, 1, 1], [], []>} : vector<2x128xbf16>, vector<128x128xbf16>, vector<2x128xf32> -> vector<2x128xf32>
    %15 = vector.broadcast %12 : vector<1x128xf32> to vector<2x128xf32>
    %16 = arith.addf %14, %15 : vector<2x128xf32>
    %cst_10 = arith.constant 0.000000e+00 : f32
    %17 = vector.broadcast %cst_10 : f32 to vector<2x128xf32>
    %18 = arith.maximumf %16, %17 : vector<2x128xf32>
    %c0_11 = arith.constant 0 : index
    %c256 = arith.constant 256 : index
    %19 = vector.load %arg1[%c0_11, %c256] : memref<128x1792xbf16, #tpu.memory_space<vmem>>, vector<128x128xbf16>
    %c0_12 = arith.constant 0 : index
    %c256_13 = arith.constant 256 : index
    %20 = vector.load %arg2[%c0_12, %c256_13] : memref<1x1792xf32, #tpu.memory_space<vmem>>, vector<1x128xf32>
    %21 = arith.truncf %18 : vector<2x128xf32> to vector<2x128xbf16>
    %cst_14 = arith.constant dense<0.000000e+00> : vector<2x128xf32>
    %22 = tpu.matmul %21, %19, %cst_14 {dimension_numbers = #tpu.dot_dimension_numbers<[1], [0], [0], [1], [0, 0, 1, 1], [], []>} : vector<2x128xbf16>, vector<128x128xbf16>, vector<2x128xf32> -> vector<2x128xf32>
    %23 = vector.broadcast %20 : vector<1x128xf32> to vector<2x128xf32>
    %24 = arith.addf %22, %23 : vector<2x128xf32>
    %cst_15 = arith.constant 0.000000e+00 : f32
    %25 = vector.broadcast %cst_15 : f32 to vector<2x128xf32>
    %26 = arith.maximumf %24, %25 : vector<2x128xf32>
    %c0_16 = arith.constant 0 : index
    %c384 = arith.constant 384 : index
    %27 = vector.load %arg1[%c0_16, %c384] : memref<128x1792xbf16, #tpu.memory_space<vmem>>, vector<128x128xbf16>
    %c0_17 = arith.constant 0 : index
    %c384_18 = arith.constant 384 : index
    %28 = vector.load %arg2[%c0_17, %c384_18] : memref<1x1792xf32, #tpu.memory_space<vmem>>, vector<1x128xf32>
    %29 = arith.truncf %26 : vector<2x128xf32> to vector<2x128xbf16>
    %cst_19 = arith.constant dense<0.000000e+00> : vector<2x128xf32>
    %30 = tpu.matmul %29, %27, %cst_19 {dimension_numbers = #tpu.dot_dimension_numbers<[1], [0], [0], [1], [0, 0, 1, 1], [], []>} : vector<2x128xbf16>, vector<128x128xbf16>, vector<2x128xf32> -> vector<2x128xf32>
    %31 = vector.broadcast %28 : vector<1x128xf32> to vector<2x128xf32>
    %32 = arith.addf %30, %31 : vector<2x128xf32>
    %cst_20 = arith.constant 0.000000e+00 : f32
    %33 = vector.broadcast %cst_20 : f32 to vector<2x128xf32>
    %34 = arith.maximumf %32, %33 : vector<2x128xf32>
    %c0_21 = arith.constant 0 : index
    %c512 = arith.constant 512 : index
    %35 = vector.load %arg1[%c0_21, %c512] : memref<128x1792xbf16, #tpu.memory_space<vmem>>, vector<128x128xbf16>
    %c0_22 = arith.constant 0 : index
    %c512_23 = arith.constant 512 : index
    %36 = vector.load %arg2[%c0_22, %c512_23] : memref<1x1792xf32, #tpu.memory_space<vmem>>, vector<1x128xf32>
    %37 = arith.truncf %34 : vector<2x128xf32> to vector<2x128xbf16>
    %cst_24 = arith.constant dense<0.000000e+00> : vector<2x128xf32>
    %38 = tpu.matmul %37, %35, %cst_24 {dimension_numbers = #tpu.dot_dimension_numbers<[1], [0], [0], [1], [0, 0, 1, 1], [], []>} : vector<2x128xbf16>, vector<128x128xbf16>, vector<2x128xf32> -> vector<2x128xf32>
    %39 = vector.broadcast %36 : vector<1x128xf32> to vector<2x128xf32>
    %40 = arith.addf %38, %39 : vector<2x128xf32>
    %cst_25 = arith.constant 0.000000e+00 : f32
    %41 = vector.broadcast %cst_25 : f32 to vector<2x128xf32>
    %42 = arith.maximumf %40, %41 : vector<2x128xf32>
    %c0_26 = arith.constant 0 : index
    %c640 = arith.constant 640 : index
    %43 = vector.load %arg1[%c0_26, %c640] : memref<128x1792xbf16, #tpu.memory_space<vmem>>, vector<128x384xbf16>
    %c0_27 = arith.constant 0 : index
    %c640_28 = arith.constant 640 : index
    %44 = vector.load %arg2[%c0_27, %c640_28] : memref<1x1792xf32, #tpu.memory_space<vmem>>, vector<1x384xf32>
    %45 = arith.truncf %42 : vector<2x128xf32> to vector<2x128xbf16>
    %cst_29 = arith.constant dense<0.000000e+00> : vector<2x384xf32>
    %46 = tpu.matmul %45, %43, %cst_29 {dimension_numbers = #tpu.dot_dimension_numbers<[1], [0], [0], [1], [0, 0, 1, 1], [], []>} : vector<2x128xbf16>, vector<128x384xbf16>, vector<2x384xf32> -> vector<2x384xf32>
    %47 = vector.broadcast %44 : vector<1x384xf32> to vector<2x384xf32>
    %48 = arith.addf %46, %47 : vector<2x384xf32>
    %49 = vector.extract_strided_slice %48 {offsets = [0, 0], sizes = [2, 128], strides = [1, 1]} : vector<2x384xf32> to vector<2x128xf32>
    %50 = vector.extract_strided_slice %48 {offsets = [0, 128], sizes = [2, 128], strides = [1, 1]} : vector<2x384xf32> to vector<2x128xf32>
    %cst_30 = arith.constant -5.000000e+00 : f32
    %cst_31 = arith.constant 5.000000e+00 : f32
    %51 = vector.broadcast %cst_30 : f32 to vector<2x128xf32>
    %52 = arith.maximumf %51, %50 : vector<2x128xf32>
    %53 = vector.broadcast %cst_31 : f32 to vector<2x128xf32>
    %54 = arith.minimumf %53, %52 : vector<2x128xf32>
    %55 = vector.extract_strided_slice %48 {offsets = [0, 256], sizes = [2, 128], strides = [1, 1]} : vector<2x384xf32> to vector<2x128xf32>
    %cst_32 = arith.constant 0.000000e+00 : f32
    %56 = vector.broadcast %cst_32 : f32 to vector<2x128xf32>
    %57 = arith.maximumf %55, %56 : vector<2x128xf32>
    %cst_33 = arith.constant 5.000000e-01 : f32
    %58 = vector.broadcast %cst_33 : f32 to vector<2x128xf32>
    %59 = arith.mulf %58, %54 : vector<2x128xf32>
    %60 = math.exp %59 : vector<2x128xf32>
    %61 = arith.mulf %2, %60 : vector<2x128xf32>
    %62 = arith.addf %49, %61 : vector<2x128xf32>
    %c0_34 = arith.constant 0 : index
    %c1024 = arith.constant 1024 : index
    %63 = vector.load %arg1[%c0_34, %c1024] : memref<128x1792xbf16, #tpu.memory_space<vmem>>, vector<128x128xbf16>
    %c0_35 = arith.constant 0 : index
    %c1024_36 = arith.constant 1024 : index
    %64 = vector.load %arg2[%c0_35, %c1024_36] : memref<1x1792xf32, #tpu.memory_space<vmem>>, vector<1x128xf32>
    %65 = arith.truncf %62 : vector<2x128xf32> to vector<2x128xbf16>
    %cst_37 = arith.constant dense<0.000000e+00> : vector<2x128xf32>
    %66 = tpu.matmul %65, %63, %cst_37 {dimension_numbers = #tpu.dot_dimension_numbers<[1], [0], [0], [1], [0, 0, 1, 1], [], []>} : vector<2x128xbf16>, vector<128x128xbf16>, vector<2x128xf32> -> vector<2x128xf32>
    %67 = vector.broadcast %64 : vector<1x128xf32> to vector<2x128xf32>
    %68 = arith.addf %66, %67 : vector<2x128xf32>
    %cst_38 = arith.constant 0.000000e+00 : f32
    %69 = vector.broadcast %cst_38 : f32 to vector<2x128xf32>
    %70 = arith.maximumf %68, %69 : vector<2x128xf32>
    %c0_39 = arith.constant 0 : index
    %c1152 = arith.constant 1152 : index
    %71 = vector.load %arg1[%c0_39, %c1152] : memref<128x1792xbf16, #tpu.memory_space<vmem>>, vector<128x128xbf16>
    %c0_40 = arith.constant 0 : index
    %c1152_41 = arith.constant 1152 : index
    %72 = vector.load %arg2[%c0_40, %c1152_41] : memref<1x1792xf32, #tpu.memory_space<vmem>>, vector<1x128xf32>
    %73 = arith.truncf %70 : vector<2x128xf32> to vector<2x128xbf16>
    %cst_42 = arith.constant dense<0.000000e+00> : vector<2x128xf32>
    %74 = tpu.matmul %73, %71, %cst_42 {dimension_numbers = #tpu.dot_dimension_numbers<[1], [0], [0], [1], [0, 0, 1, 1], [], []>} : vector<2x128xbf16>, vector<128x128xbf16>, vector<2x128xf32> -> vector<2x128xf32>
    %75 = vector.broadcast %72 : vector<1x128xf32> to vector<2x128xf32>
    %76 = arith.addf %74, %75 : vector<2x128xf32>
    %cst_43 = arith.constant 0.000000e+00 : f32
    %77 = vector.broadcast %cst_43 : f32 to vector<2x128xf32>
    %78 = arith.maximumf %76, %77 : vector<2x128xf32>
    %c0_44 = arith.constant 0 : index
    %c1280 = arith.constant 1280 : index
    %79 = vector.load %arg1[%c0_44, %c1280] : memref<128x1792xbf16, #tpu.memory_space<vmem>>, vector<128x128xbf16>
    %c0_45 = arith.constant 0 : index
    %c1280_46 = arith.constant 1280 : index
    %80 = vector.load %arg2[%c0_45, %c1280_46] : memref<1x1792xf32, #tpu.memory_space<vmem>>, vector<1x128xf32>
    %81 = arith.truncf %78 : vector<2x128xf32> to vector<2x128xbf16>
    %cst_47 = arith.constant dense<0.000000e+00> : vector<2x128xf32>
    %82 = tpu.matmul %81, %79, %cst_47 {dimension_numbers = #tpu.dot_dimension_numbers<[1], [0], [0], [1], [0, 0, 1, 1], [], []>} : vector<2x128xbf16>, vector<128x128xbf16>, vector<2x128xf32> -> vector<2x128xf32>
    %83 = vector.broadcast %80 : vector<1x128xf32> to vector<2x128xf32>
    %84 = arith.addf %82, %83 : vector<2x128xf32>
    %cst_48 = arith.constant 0.000000e+00 : f32
    %85 = vector.broadcast %cst_48 : f32 to vector<2x128xf32>
    %86 = arith.maximumf %84, %85 : vector<2x128xf32>
    %c0_49 = arith.constant 0 : index
    %c1408 = arith.constant 1408 : index
    %87 = vector.load %arg1[%c0_49, %c1408] : memref<128x1792xbf16, #tpu.memory_space<vmem>>, vector<128x128xbf16>
    %c0_50 = arith.constant 0 : index
    %c1408_51 = arith.constant 1408 : index
    %88 = vector.load %arg2[%c0_50, %c1408_51] : memref<1x1792xf32, #tpu.memory_space<vmem>>, vector<1x128xf32>
    %89 = arith.truncf %86 : vector<2x128xf32> to vector<2x128xbf16>
    %cst_52 = arith.constant dense<0.000000e+00> : vector<2x128xf32>
    %90 = tpu.matmul %89, %87, %cst_52 {dimension_numbers = #tpu.dot_dimension_numbers<[1], [0], [0], [1], [0, 0, 1, 1], [], []>} : vector<2x128xbf16>, vector<128x128xbf16>, vector<2x128xf32> -> vector<2x128xf32>
    %91 = vector.broadcast %88 : vector<1x128xf32> to vector<2x128xf32>
    %92 = arith.addf %90, %91 : vector<2x128xf32>
    %cst_53 = arith.constant 0.000000e+00 : f32
    %93 = vector.broadcast %cst_53 : f32 to vector<2x128xf32>
    %94 = arith.maximumf %92, %93 : vector<2x128xf32>
    %c0_54 = arith.constant 0 : index
    %c1536 = arith.constant 1536 : index
    %95 = vector.load %arg1[%c0_54, %c1536] : memref<128x1792xbf16, #tpu.memory_space<vmem>>, vector<128x128xbf16>
    %c0_55 = arith.constant 0 : index
    %c1536_56 = arith.constant 1536 : index
    %96 = vector.load %arg2[%c0_55, %c1536_56] : memref<1x1792xf32, #tpu.memory_space<vmem>>, vector<1x128xf32>
    %97 = arith.truncf %94 : vector<2x128xf32> to vector<2x128xbf16>
    %cst_57 = arith.constant dense<0.000000e+00> : vector<2x128xf32>
    %98 = tpu.matmul %97, %95, %cst_57 {dimension_numbers = #tpu.dot_dimension_numbers<[1], [0], [0], [1], [0, 0, 1, 1], [], []>} : vector<2x128xbf16>, vector<128x128xbf16>, vector<2x128xf32> -> vector<2x128xf32>
    %99 = vector.broadcast %96 : vector<1x128xf32> to vector<2x128xf32>
    %100 = arith.addf %98, %99 : vector<2x128xf32>
    %c0_58 = arith.constant 0 : index
    %c1664 = arith.constant 1664 : index
    %101 = vector.load %arg1[%c0_58, %c1664] : memref<128x1792xbf16, #tpu.memory_space<vmem>>, vector<128x128xbf16>
    %c0_59 = arith.constant 0 : index
    %c1664_60 = arith.constant 1664 : index
    %102 = vector.load %arg2[%c0_59, %c1664_60] : memref<1x1792xf32, #tpu.memory_space<vmem>>, vector<1x128xf32>
    %103 = arith.truncf %57 : vector<2x128xf32> to vector<2x128xbf16>
    %cst_61 = arith.constant dense<0.000000e+00> : vector<2x128xf32>
    %104 = tpu.matmul %103, %101, %cst_61 {dimension_numbers = #tpu.dot_dimension_numbers<[1], [0], [0], [1], [0, 0, 1, 1], [], []>} : vector<2x128xbf16>, vector<128x128xbf16>, vector<2x128xf32> -> vector<2x128xf32>
    %105 = vector.broadcast %102 : vector<1x128xf32> to vector<2x128xf32>
    %106 = arith.addf %104, %105 : vector<2x128xf32>
    %c0_62 = arith.constant 0 : index
    %c0_63 = arith.constant 0 : index
    %107 = vector.load %arg3[%c0_62, %c0_63] : memref<2x640xf32, #tpu.memory_space<vmem>>, vector<2x128xf32>
    tpu.vector_store %arg3[%c0_62, %c0_63], %42 {strides = array<i32>} : memref<2x640xf32, #tpu.memory_space<vmem>>, vector<2x128xf32>,
    %c0_64 = arith.constant 0 : index
    %c128_65 = arith.constant 128 : index
    %108 = vector.load %arg3[%c0_64, %c128_65] : memref<2x640xf32, #tpu.memory_space<vmem>>, vector<2x128xf32>
    tpu.vector_store %arg3[%c0_64, %c128_65], %100 {strides = array<i32>} : memref<2x640xf32, #tpu.memory_space<vmem>>, vector<2x128xf32>,
    %c0_66 = arith.constant 0 : index
    %c256_67 = arith.constant 256 : index
    %109 = vector.load %arg3[%c0_66, %c256_67] : memref<2x640xf32, #tpu.memory_space<vmem>>, vector<2x128xf32>
    tpu.vector_store %arg3[%c0_66, %c256_67], %49 {strides = array<i32>} : memref<2x640xf32, #tpu.memory_space<vmem>>, vector<2x128xf32>,
    %c0_68 = arith.constant 0 : index
    %c384_69 = arith.constant 384 : index
    %110 = vector.load %arg3[%c0_68, %c384_69] : memref<2x640xf32, #tpu.memory_space<vmem>>, vector<2x128xf32>
    tpu.vector_store %arg3[%c0_68, %c384_69], %54 {strides = array<i32>} : memref<2x640xf32, #tpu.memory_space<vmem>>, vector<2x128xf32>,
    %c0_70 = arith.constant 0 : index
    %c512_71 = arith.constant 512 : index
    %111 = vector.load %arg3[%c0_70, %c512_71] : memref<2x640xf32, #tpu.memory_space<vmem>>, vector<2x128xf32>
    tpu.vector_store %arg3[%c0_70, %c512_71], %106 {strides = array<i32>} : memref<2x640xf32, #tpu.memory_space<vmem>>, vector<2x128xf32>,
    return
  }
}

</mosaic_0001>

<llo_original>
// kernel: forward.1
$region0: #{forward.1}
  #allocation0 [shape = 'u32[]', space=smem, size = 0x4, offset = 0x4, fixed_abs, tag = 'smem constant byte address 0x4 - core index']
  #allocation1 [shape = 'u32[144,128]{1,0:T(1,128)}', space=vmem, size = 0x12000, scoped, tag = 'internal scratch']
  %s0 = inlined_call_operand.vmem [shape: f32[2,256], index: 0, kind: input, shape index: {}]
  %s1 = inlined_call_operand.hbm [shape: bf16[128,1792], index: 1, kind: input, shape index: {}]
  %s2 = inlined_call_operand.vmem [shape: f32[1,1792], index: 2, kind: input, shape index: {}]
  %s3 = inlined_call_operand.vmem [shape: f32[2,640], index: 3, kind: output, shape index: {}]
  %s4 = sld [smem:[#allocation0]]
  $region26: #{forward.1} parent=0
    _
  %s6 = ssub.s32 1, %s4
  %s7 = scalar_select 0, %s6, %s4
  $region1: #{forward.1} parent=0
    #allocation2 [shape = 'u8[458752]{0}', space=vmem, size = 0x70000, scoped, tag = 'input window, operand 1, single buffered']
    #allocation3 [shape = 's32[1]{0}', space=sflag, size = 0x4, scoped, tag = 'scoped memory for forward.1']
    %8 = vsyncpa [#allocation3], 0
    // Predicated region
    $region2: #{forward.1} parent=1 // pred_check
      _
    $region3: #{forward.1} parent=1 // pred_check_branch
      %10 = sbr.rel (0) target = $region5
    $region4: #{forward.1} parent=1 // pred_region
      _
    $region5: #{forward.1} parent=1 // pred_fallthru
      _
    // Predicated region
    $region6: #{forward.1} parent=1 // pred_check
      _
    $region7: #{forward.1} parent=1 // pred_check_branch
      %12 = sbr.rel (0) target = $region9
    $region8: #{forward.1} parent=1 // pred_region
      %s14 = ssub.s32 14336, 14336
      %15 = vsyncadd [#allocation3], %s14
      %s16 = sshll.u32 [#allocation2], 4
      %s17 = int_to_ptr.vmem [resolvable:$true] %s16
      %22 = dma.hbm_to_vmem [thread:$0]  %s1, 14336, %s17, [#allocation3], 896, 896, 56
    $region9: #{forward.1} parent=1 // pred_fallthru
      _
    // Predicated region
    $region10: #{forward.1} parent=1 // pred_check
      _
    $region11: #{forward.1} parent=1 // pred_check_branch
      %24 = sbr.rel (0) target = $region13
    $region12: #{forward.1} parent=1 // pred_region
      _
    $region13: #{forward.1} parent=1 // pred_fallthru
      _
    // Predicated region
    $region14: #{forward.1} parent=1 // pred_check
      _
    $region15: #{forward.1} parent=1 // pred_check_branch
      %26 = sbr.rel (0) target = $region17
    $region16: #{forward.1} parent=1 // pred_region
      %27 = dma.done [#allocation3], 14336
    $region17: #{forward.1} parent=1 // pred_fallthru
      _
    %v29 = vld [vmem:[%s0] sm:$0xf]
    %v30 = vld [vmem:[#allocation2] sm:$0xf]
    %v31 = vld [vmem:[#allocation2 + $0x38] sm:$0xf]
    %v32 = vld [vmem:[#allocation2 + $0x70] sm:$0xf]
    %v33 = vld [vmem:[#allocation2 + $0xa8] sm:$0xf]
    %v34 = vld [vmem:[#allocation2 + $0xe0] sm:$0xf]
    %v35 = vld [vmem:[#allocation2 + $0x118] sm:$0xf]
    %v36 = vld [vmem:[#allocation2 + $0x150] sm:$0xf]
    %v37 = vld [vmem:[#allocation2 + $0x188] sm:$0xf]
    %v38 = vld [vmem:[#allocation2 + $0x1c0] sm:$0xf]
    %v39 = vld [vmem:[#allocation2 + $0x1f8] sm:$0xf]
    %v40 = vld [vmem:[#allocation2 + $0x230] sm:$0xf]
    %v41 = vld [vmem:[#allocation2 + $0x268] sm:$0xf]
    %v42 = vld [vmem:[#allocation2 + $0x2a0] sm:$0xf]
    %v43 = vld [vmem:[#allocation2 + $0x2d8] sm:$0xf]
    %v44 = vld [vmem:[#allocation2 + $0x310] sm:$0xf]
    %v45 = vld [vmem:[#allocation2 + $0x348] sm:$0xf]
    %v46 = vld [vmem:[%s2] sm:$0x1]
    %v47 = vpack.c.bf16 %v29, %v29
    %v49 = vlaneseq
    %v50 = vshrl.u32 %v49, 7
    %v51 = vsub.s32 0, %v50
    %v52 = vrot.slane %v46, %v51
    %v70 = vunpack.c.l.b16 %v30
    %v71 = vunpack.c.l.b16 %v31
    %v72 = vunpack.c.l.b16 %v32
    %v73 = vunpack.c.l.b16 %v33
    %v74 = vunpack.c.l.b16 %v34
    %v75 = vunpack.c.l.b16 %v35
    %v76 = vunpack.c.l.b16 %v36
    %v77 = vunpack.c.l.b16 %v37
    %v78 = vunpack.c.l.b16 %v38
    %v79 = vunpack.c.l.b16 %v39
    %v80 = vunpack.c.l.b16 %v40
    %v81 = vunpack.c.l.b16 %v41
    %v82 = vunpack.c.l.b16 %v42
    %v83 = vunpack.c.l.b16 %v43
    %v84 = vunpack.c.l.b16 %v44
    %v85 = vunpack.c.l.b16 %v45
    %v86 = vpack.c.b16 %v71, %v70
    %v87 = vpack.c.b16 %v73, %v72
    %v88 = vpack.c.b16 %v75, %v74
    %v89 = vpack.c.b16 %v77, %v76
    %v90 = vpack.c.b16 %v79, %v78
    %v91 = vpack.c.b16 %v81, %v80
    %v92 = vpack.c.b16 %v83, %v82
    %v93 = vpack.c.b16 %v85, %v84
    %102 = vmatprep.subr.bf16.mxu0 0
    %103 = vmatpush1.bf16.msra.mxu0 %v86
    %104 = vmatprep.subr.bf16.mxu0 0
    %105 = vmatpush1.bf16.msra.mxu0 %v87
    %106 = vmatprep.subr.bf16.mxu0 0
    %107 = vmatpush1.bf16.msra.mxu0 %v88
    %108 = vmatprep.subr.bf16.mxu0 0
    %109 = vmatpush1.bf16.msra.mxu0 %v89
    %110 = vmatprep.subr.bf16.mxu0 0
    %111 = vmatpush1.bf16.msra.mxu0 %v90
    %112 = vmatprep.subr.bf16.mxu0 0
    %113 = vmatpush1.bf16.msra.mxu0 %v91
    %114 = vmatprep.subr.bf16.mxu0 0
    %115 = vmatpush1.bf16.msra.mxu0 %v92
    %116 = vmatprep.subr.bf16.mxu0 0
    %117 = vmatpush1.bf16.msra.mxu0 %v93
    %118 = vmatprep.subr.bf16.mxu0 0
    %119 = vmatpush1.bf16.msra.mxu0 0
    %120 = vmatprep.subr.bf16.mxu0 0
    %121 = vmatpush1.bf16.msra.mxu0 0
    %122 = vmatprep.subr.bf16.mxu0 0
    %123 = vmatpush1.bf16.msra.mxu0 0
    %124 = vmatprep.subr.bf16.mxu0 0
    %125 = vmatpush1.bf16.msra.mxu0 0
    %126 = vmatprep.subr.bf16.mxu0 0
    %127 = vmatpush1.bf16.msra.mxu0 0
    %128 = vmatprep.subr.bf16.mxu0 0
    %129 = vmatpush1.bf16.msra.mxu0 0
    %130 = vmatprep.subr.bf16.mxu0 0
    %131 = vmatpush1.bf16.msra.mxu0 0
    %132 = vmatprep.subr.bf16.mxu0 0
    %133 = vmatpush1.bf16.msra.mxu0 0
    %134 = vmatprep.mubr.bf16.mxu0 0
    %135 = vmatmul.mubr.bf16.gmra.mrb[0].mxu0 %v47
    %v136 = vpop.f32.mrb[0].mxu0
    %v137 = vadd.f32 %v52, %v136
    %v138 = vpop.f32.mrb[0].mxu0
    %v139 = vpop.f32.mrb[0].mxu0
    %v140 = vpop.f32.mrb[0].mxu0
    %141 = vdwg.mxu0
    %v142 = vmax.f32 %v137, 0.0
    %v143 = vld [vmem:[#allocation2 + $0x4] sm:$0xf]
    %v144 = vld [vmem:[#allocation2 + $0x3c] sm:$0xf]
    %v145 = vld [vmem:[#allocation2 + $0x74] sm:$0xf]
    %v146 = vld [vmem:[#allocation2 + $0xac] sm:$0xf]
    %v147 = vld [vmem:[#allocation2 + $0xe4] sm:$0xf]
    %v148 = vld [vmem:[#allocation2 + $0x11c] sm:$0xf]
    %v149 = vld [vmem:[#allocation2 + $0x154] sm:$0xf]
    %v150 = vld [vmem:[#allocation2 + $0x18c] sm:$0xf]
    %v151 = vld [vmem:[#allocation2 + $0x1c4] sm:$0xf]
    %v152 = vld [vmem:[#allocation2 + $0x1fc] sm:$0xf]
    %v153 = vld [vmem:[#allocation2 + $0x234] sm:$0xf]
    %v154 = vld [vmem:[#allocation2 + $0x26c] sm:$0xf]
    %v155 = vld [vmem:[#allocation2 + $0x2a4] sm:$0xf]
    %v156 = vld [vmem:[#allocation2 + $0x2dc] sm:$0xf]
    %v157 = vld [vmem:[#allocation2 + $0x314] sm:$0xf]
    %v158 = vld [vmem:[#allocation2 + $0x34c] sm:$0xf]
    %v159 = vld [vmem:[%s2 + $0x1] sm:$0x1]
    %v160 = vpack.c.bf16 %v142, %v142
    %v162 = vlaneseq
    %v163 = vshrl.u32 %v162, 7
    %v164 = vsub.s32 0, %v163
    %v165 = vrot.slane %v159, %v164
    %v183 = vunpack.c.l.b16 %v143
    %v184 = vunpack.c.l.b16 %v144
    %v185 = vunpack.c.l.b16 %v145
    %v186 = vunpack.c.l.b16 %v146
    %v187 = vunpack.c.l.b16 %v147
    %v188 = vunpack.c.l.b16 %v148
    %v189 = vunpack.c.l.b16 %v149
    %v190 = vunpack.c.l.b16 %v150
    %v191 = vunpack.c.l.b16 %v151
    %v192 = vunpack.c.l.b16 %v152
    %v193 = vunpack.c.l.b16 %v153
    %v194 = vunpack.c.l.b16 %v154
    %v195 = vunpack.c.l.b16 %v155
    %v196 = vunpack.c.l.b16 %v156
    %v197 = vunpack.c.l.b16 %v157
    %v198 = vunpack.c.l.b16 %v158
    %v199 = vpack.c.b16 %v184, %v183
    %v200 = vpack.c.b16 %v186, %v185
    %v201 = vpack.c.b16 %v188, %v187
    %v202 = vpack.c.b16 %v190, %v189
    %v203 = vpack.c.b16 %v192, %v191
    %v204 = vpack.c.b16 %v194, %v193
    %v205 = vpack.c.b16 %v196, %v195
    %v206 = vpack.c.b16 %v198, %v197
    %215 = vmatprep.subr.bf16.mxu0 0
    %216 = vmatpush1.bf16.msra.mxu0 %v199
    %217 = vmatprep.subr.bf16.mxu0 0
    %218 = vmatpush1.bf16.msra.mxu0 %v200
    %219 = vmatprep.subr.bf16.mxu0 0
    %220 = vmatpush1.bf16.msra.mxu0 %v201
    %221 = vmatprep.subr.bf16.mxu0 0
    %222 = vmatpush1.bf16.msra.mxu0 %v202
    %223 = vmatprep.subr.bf16.mxu0 0
    %224 = vmatpush1.bf16.msra.mxu0 %v203
    %225 = vmatprep.subr.bf16.mxu0 0
    %226 = vmatpush1.bf16.msra.mxu0 %v204
    %227 = vmatprep.subr.bf16.mxu0 0
    %228 = vmatpush1.bf16.msra.mxu0 %v205
    %229 = vmatprep.subr.bf16.mxu0 0
    %230 = vmatpush1.bf16.msra.mxu0 %v206
    %231 = vmatprep.subr.bf16.mxu0 0
    %232 = vmatpush1.bf16.msra.mxu0 0
    %233 = vmatprep.subr.bf16.mxu0 0
    %234 = vmatpush1.bf16.msra.mxu0 0
    %235 = vmatprep.subr.bf16.mxu0 0
    %236 = vmatpush1.bf16.msra.mxu0 0
    %237 = vmatprep.subr.bf16.mxu0 0
    %238 = vmatpush1.bf16.msra.mxu0 0
    %239 = vmatprep.subr.bf16.mxu0 0
    %240 = vmatpush1.bf16.msra.mxu0 0
    %241 = vmatprep.subr.bf16.mxu0 0
    %242 = vmatpush1.bf16.msra.mxu0 0
    %243 = vmatprep.subr.bf16.mxu0 0
    %244 = vmatpush1.bf16.msra.mxu0 0
    %245 = vmatprep.subr.bf16.mxu0 0
    %246 = vmatpush1.bf16.msra.mxu0 0
    %247 = vmatprep.mubr.bf16.mxu0 0
    %248 = vmatmul.mubr.bf16.gmra.mrb[0].mxu0 %v160
    %v249 = vpop.f32.mrb[0].mxu0
    %v250 = vadd.f32 %v165, %v249
    %v251 = vpop.f32.mrb[0].mxu0
    %v252 = vpop.f32.mrb[0].mxu0
    %v253 = vpop.f32.mrb[0].mxu0
    %254 = vdwg.mxu0
    %v255 = vmax.f32 %v250, 0.0
    %v256 = vld [vmem:[#allocation2 + $0x8] sm:$0xf]
    %v257 = vld [vmem:[#allocation2 + $0x40] sm:$0xf]
    %v258 = vld [vmem:[#allocation2 + $0x78] sm:$0xf]
    %v259 = vld [vmem:[#allocation2 + $0xb0] sm:$0xf]
    %v260 = vld [vmem:[#allocation2 + $0xe8] sm:$0xf]
    %v261 = vld [vmem:[#allocation2 + $0x120] sm:$0xf]
    %v262 = vld [vmem:[#allocation2 + $0x158] sm:$0xf]
    %v263 = vld [vmem:[#allocation2 + $0x190] sm:$0xf]
    %v264 = vld [vmem:[#allocation2 + $0x1c8] sm:$0xf]
    %v265 = vld [vmem:[#allocation2 + $0x200] sm:$0xf]
    %v266 = vld [vmem:[#allocation2 + $0x238] sm:$0xf]
    %v267 = vld [vmem:[#allocation2 + $0x270] sm:$0xf]
    %v268 = vld [vmem:[#allocation2 + $0x2a8] sm:$0xf]
    %v269 = vld [vmem:[#allocation2 + $0x2e0] sm:$0xf]
    %v270 = vld [vmem:[#allocation2 + $0x318] sm:$0xf]
    %v271 = vld [vmem:[#allocation2 + $0x350] sm:$0xf]
    %v272 = vld [vmem:[%s2 + $0x2] sm:$0x1]
    %v273 = vpack.c.bf16 %v255, %v255
    %v275 = vlaneseq
    %v276 = vshrl.u32 %v275, 7
    %v277 = vsub.s32 0, %v276
    %v278 = vrot.slane %v272, %v277
    %v296 = vunpack.c.l.b16 %v256
    %v297 = vunpack.c.l.b16 %v257
    %v298 = vunpack.c.l.b16 %v258
    %v299 = vunpack.c.l.b16 %v259
    %v300 = vunpack.c.l.b16 %v260
    %v301 = vunpack.c.l.b16 %v261
    %v302 = vunpack.c.l.b16 %v262
    %v303 = vunpack.c.l.b16 %v263
    %v304 = vunpack.c.l.b16 %v264
    %v305 = vunpack.c.l.b16 %v265
    %v306 = vunpack.c.l.b16 %v266
    %v307 = vunpack.c.l.b16 %v267
    %v308 = vunpack.c.l.b16 %v268
    %v309 = vunpack.c.l.b16 %v269
    %v310 = vunpack.c.l.b16 %v270
    %v311 = vunpack.c.l.b16 %v271
    %v312 = vpack.c.b16 %v297, %v296
    %v313 = vpack.c.b16 %v299, %v298
    %v314 = vpack.c.b16 %v301, %v300
    %v315 = vpack.c.b16 %v303, %v302
    %v316 = vpack.c.b16 %v305, %v304
    %v317 = vpack.c.b16 %v307, %v306
    %v318 = vpack.c.b16 %v309, %v308
    %v319 = vpack.c.b16 %v311, %v310
    %328 = vmatprep.subr.bf16.mxu0 0
    %329 = vmatpush1.bf16.msra.mxu0 %v312
    %330 = vmatprep.subr.bf16.mxu0 0
    %331 = vmatpush1.bf16.msra.mxu0 %v313
    %332 = vmatprep.subr.bf16.mxu0 0
    %333 = vmatpush1.bf16.msra.mxu0 %v314
    %334 = vmatprep.subr.bf16.mxu0 0
    %335 = vmatpush1.bf16.msra.mxu0 %v315
    %336 = vmatprep.subr.bf16.mxu0 0
    %337 = vmatpush1.bf16.msra.mxu0 %v316
    %338 = vmatprep.subr.bf16.mxu0 0
    %339 = vmatpush1.bf16.msra.mxu0 %v317
    %340 = vmatprep.subr.bf16.mxu0 0
    %341 = vmatpush1.bf16.msra.mxu0 %v318
    %342 = vmatprep.subr.bf16.mxu0 0
    %343 = vmatpush1.bf16.msra.mxu0 %v319
    %344 = vmatprep.subr.bf16.mxu0 0
    %345 = vmatpush1.bf16.msra.mxu0 0
    %346 = vmatprep.subr.bf16.mxu0 0
    %347 = vmatpush1.bf16.msra.mxu0 0
    %348 = vmatprep.subr.bf16.mxu0 0
    %349 = vmatpush1.bf16.msra.mxu0 0
    %350 = vmatprep.subr.bf16.mxu0 0
    %351 = vmatpush1.bf16.msra.mxu0 0
    %352 = vmatprep.subr.bf16.mxu0 0
    %353 = vmatpush1.bf16.msra.mxu0 0
    %354 = vmatprep.subr.bf16.mxu0 0
    %355 = vmatpush1.bf16.msra.mxu0 0
    %356 = vmatprep.subr.bf16.mxu0 0
    %357 = vmatpush1.bf16.msra.mxu0 0
    %358 = vmatprep.subr.bf16.mxu0 0
    %359 = vmatpush1.bf16.msra.mxu0 0
    %360 = vmatprep.mubr.bf16.mxu0 0
    %361 = vmatmul.mubr.bf16.gmra.mrb[0].mxu0 %v273
    %v362 = vpop.f32.mrb[0].mxu0
    %v363 = vadd.f32 %v278, %v362
    %v364 = vpop.f32.mrb[0].mxu0
    %v365 = vpop.f32.mrb[0].mxu0
    %v366 = vpop.f32.mrb[0].mxu0
    %367 = vdwg.mxu0
    %v368 = vmax.f32 %v363, 0.0
    %v369 = vld [vmem:[#allocation2 + $0xc] sm:$0xf]
    %v370 = vld [vmem:[#allocation2 + $0x44] sm:$0xf]
    %v371 = vld [vmem:[#allocation2 + $0x7c] sm:$0xf]
    %v372 = vld [vmem:[#allocation2 + $0xb4] sm:$0xf]
    %v373 = vld [vmem:[#allocation2 + $0xec] sm:$0xf]
    %v374 = vld [vmem:[#allocation2 + $0x124] sm:$0xf]
    %v375 = vld [vmem:[#allocation2 + $0x15c] sm:$0xf]
    %v376 = vld [vmem:[#allocation2 + $0x194] sm:$0xf]
    %v377 = vld [vmem:[#allocation2 + $0x1cc] sm:$0xf]
    %v378 = vld [vmem:[#allocation2 + $0x204] sm:$0xf]
    %v379 = vld [vmem:[#allocation2 + $0x23c] sm:$0xf]
    %v380 = vld [vmem:[#allocation2 + $0x274] sm:$0xf]
    %v381 = vld [vmem:[#allocation2 + $0x2ac] sm:$0xf]
    %v382 = vld [vmem:[#allocation2 + $0x2e4] sm:$0xf]
    %v383 = vld [vmem:[#allocation2 + $0x31c] sm:$0xf]
    %v384 = vld [vmem:[#allocation2 + $0x354] sm:$0xf]
    %v385 = vld [vmem:[%s2 + $0x3] sm:$0x1]
    %v386 = vpack.c.bf16 %v368, %v368
    %v388 = vlaneseq
    %v389 = vshrl.u32 %v388, 7
    %v390 = vsub.s32 0, %v389
    %v391 = vrot.slane %v385, %v390
    %v409 = vunpack.c.l.b16 %v369
    %v410 = vunpack.c.l.b16 %v370
    %v411 = vunpack.c.l.b16 %v371
    %v412 = vunpack.c.l.b16 %v372
    %v413 = vunpack.c.l.b16 %v373
    %v414 = vunpack.c.l.b16 %v374
    %v415 = vunpack.c.l.b16 %v375
    %v416 = vunpack.c.l.b16 %v376
    %v417 = vunpack.c.l.b16 %v377
    %v418 = vunpack.c.l.b16 %v378
    %v419 = vunpack.c.l.b16 %v379
    %v420 = vunpack.c.l.b16 %v380
    %v421 = vunpack.c.l.b16 %v381
    %v422 = vunpack.c.l.b16 %v382
    %v423 = vunpack.c.l.b16 %v383
    %v424 = vunpack.c.l.b16 %v384
    %v425 = vpack.c.b16 %v410, %v409
    %v426 = vpack.c.b16 %v412, %v411
    %v427 = vpack.c.b16 %v414, %v413
    %v428 = vpack.c.b16 %v416, %v415
    %v429 = vpack.c.b16 %v418, %v417
    %v430 = vpack.c.b16 %v420, %v419
    %v431 = vpack.c.b16 %v422, %v421
    %v432 = vpack.c.b16 %v424, %v423
    %441 = vmatprep.subr.bf16.mxu0 0
    %442 = vmatpush1.bf16.msra.mxu0 %v425
    %443 = vmatprep.subr.bf16.mxu0 0
    %444 = vmatpush1.bf16.msra.mxu0 %v426
    %445 = vmatprep.subr.bf16.mxu0 0
    %446 = vmatpush1.bf16.msra.mxu0 %v427
    %447 = vmatprep.subr.bf16.mxu0 0
    %448 = vmatpush1.bf16.msra.mxu0 %v428
    %449 = vmatprep.subr.bf16.mxu0 0
    %450 = vmatpush1.bf16.msra.mxu0 %v429
    %451 = vmatprep.subr.bf16.mxu0 0
    %452 = vmatpush1.bf16.msra.mxu0 %v430
    %453 = vmatprep.subr.bf16.mxu0 0
    %454 = vmatpush1.bf16.msra.mxu0 %v431
    %455 = vmatprep.subr.bf16.mxu0 0
    %456 = vmatpush1.bf16.msra.mxu0 %v432
    %457 = vmatprep.subr.bf16.mxu0 0
    %458 = vmatpush1.bf16.msra.mxu0 0
    %459 = vmatprep.subr.bf16.mxu0 0
    %460 = vmatpush1.bf16.msra.mxu0 0
    %461 = vmatprep.subr.bf16.mxu0 0
    %462 = vmatpush1.bf16.msra.mxu0 0
    %463 = vmatprep.subr.bf16.mxu0 0
    %464 = vmatpush1.bf16.msra.mxu0 0
    %465 = vmatprep.subr.bf16.mxu0 0
    %466 = vmatpush1.bf16.msra.mxu0 0
    %467 = vmatprep.subr.bf16.mxu0 0
    %468 = vmatpush1.bf16.msra.mxu0 0
    %469 = vmatprep.subr.bf16.mxu0 0
    %470 = vmatpush1.bf16.msra.mxu0 0
    %471 = vmatprep.subr.bf16.mxu0 0
    %472 = vmatpush1.bf16.msra.mxu0 0
    %473 = vmatprep.mubr.bf16.mxu0 0
    %474 = vmatmul.mubr.bf16.gmra.mrb[0].mxu0 %v386
    %v475 = vpop.f32.mrb[0].mxu0
    %v476 = vadd.f32 %v391, %v475
    %v477 = vpop.f32.mrb[0].mxu0
    %v478 = vpop.f32.mrb[0].mxu0
    %v479 = vpop.f32.mrb[0].mxu0
    %480 = vdwg.mxu0
    %v481 = vmax.f32 %v476, 0.0
    %v482 = vld [vmem:[#allocation2 + $0x10] sm:$0xf]
    %v483 = vld [vmem:[#allocation2 + $0x48] sm:$0xf]
    %v484 = vld [vmem:[#allocation2 + $0x80] sm:$0xf]
    %v485 = vld [vmem:[#allocation2 + $0xb8] sm:$0xf]
    %v486 = vld [vmem:[#allocation2 + $0xf0] sm:$0xf]
    %v487 = vld [vmem:[#allocation2 + $0x128] sm:$0xf]
    %v488 = vld [vmem:[#allocation2 + $0x160] sm:$0xf]
    %v489 = vld [vmem:[#allocation2 + $0x198] sm:$0xf]
    %v490 = vld [vmem:[#allocation2 + $0x1d0] sm:$0xf]
    %v491 = vld [vmem:[#allocation2 + $0x208] sm:$0xf]
    %v492 = vld [vmem:[#allocation2 + $0x240] sm:$0xf]
    %v493 = vld [vmem:[#allocation2 + $0x278] sm:$0xf]
    %v494 = vld [vmem:[#allocation2 + $0x2b0] sm:$0xf]
    %v495 = vld [vmem:[#allocation2 + $0x2e8] sm:$0xf]
    %v496 = vld [vmem:[#allocation2 + $0x320] sm:$0xf]
    %v497 = vld [vmem:[#allocation2 + $0x358] sm:$0xf]
    %v498 = vld [vmem:[%s2 + $0x4] sm:$0x1]
    %v499 = vpack.c.bf16 %v481, %v481
    %v501 = vlaneseq
    %v502 = vshrl.u32 %v501, 7
    %v503 = vsub.s32 0, %v502
    %v504 = vrot.slane %v498, %v503
    %v522 = vunpack.c.l.b16 %v482
    %v523 = vunpack.c.l.b16 %v483
    %v524 = vunpack.c.l.b16 %v484
    %v525 = vunpack.c.l.b16 %v485
    %v526 = vunpack.c.l.b16 %v486
    %v527 = vunpack.c.l.b16 %v487
    %v528 = vunpack.c.l.b16 %v488
    %v529 = vunpack.c.l.b16 %v489
    %v530 = vunpack.c.l.b16 %v490
    %v531 = vunpack.c.l.b16 %v491
    %v532 = vunpack.c.l.b16 %v492
    %v533 = vunpack.c.l.b16 %v493
    %v534 = vunpack.c.l.b16 %v494
    %v535 = vunpack.c.l.b16 %v495
    %v536 = vunpack.c.l.b16 %v496
    %v537 = vunpack.c.l.b16 %v497
    %v538 = vpack.c.b16 %v523, %v522
    %v539 = vpack.c.b16 %v525, %v524
    %v540 = vpack.c.b16 %v527, %v526
    %v541 = vpack.c.b16 %v529, %v528
    %v542 = vpack.c.b16 %v531, %v530
    %v543 = vpack.c.b16 %v533, %v532
    %v544 = vpack.c.b16 %v535, %v534
    %v545 = vpack.c.b16 %v537, %v536
    %554 = vmatprep.subr.bf16.mxu0 0
    %555 = vmatpush1.bf16.msra.mxu0 %v538
    %556 = vmatprep.subr.bf16.mxu0 0
    %557 = vmatpush1.bf16.msra.mxu0 %v539
    %558 = vmatprep.subr.bf16.mxu0 0
    %559 = vmatpush1.bf16.msra.mxu0 %v540
    %560 = vmatprep.subr.bf16.mxu0 0
    %561 = vmatpush1.bf16.msra.mxu0 %v541
    %562 = vmatprep.subr.bf16.mxu0 0
    %563 = vmatpush1.bf16.msra.mxu0 %v542
    %564 = vmatprep.subr.bf16.mxu0 0
    %565 = vmatpush1.bf16.msra.mxu0 %v543
    %566 = vmatprep.subr.bf16.mxu0 0
    %567 = vmatpush1.bf16.msra.mxu0 %v544
    %568 = vmatprep.subr.bf16.mxu0 0
    %569 = vmatpush1.bf16.msra.mxu0 %v545
    %570 = vmatprep.subr.bf16.mxu0 0
    %571 = vmatpush1.bf16.msra.mxu0 0
    %572 = vmatprep.subr.bf16.mxu0 0
    %573 = vmatpush1.bf16.msra.mxu0 0
    %574 = vmatprep.subr.bf16.mxu0 0
    %575 = vmatpush1.bf16.msra.mxu0 0
    %576 = vmatprep.subr.bf16.mxu0 0
    %577 = vmatpush1.bf16.msra.mxu0 0
    %578 = vmatprep.subr.bf16.mxu0 0
    %579 = vmatpush1.bf16.msra.mxu0 0
    %580 = vmatprep.subr.bf16.mxu0 0
    %581 = vmatpush1.bf16.msra.mxu0 0
    %582 = vmatprep.subr.bf16.mxu0 0
    %583 = vmatpush1.bf16.msra.mxu0 0
    %584 = vmatprep.subr.bf16.mxu0 0
    %585 = vmatpush1.bf16.msra.mxu0 0
    %586 = vmatprep.mubr.bf16.mxu0 0
    %587 = vmatmul.mubr.bf16.gmra.mrb[0].mxu0 %v499
    %v588 = vpop.f32.mrb[0].mxu0
    %v589 = vadd.f32 %v504, %v588
    %v590 = vpop.f32.mrb[0].mxu0
    %v591 = vpop.f32.mrb[0].mxu0
    %v592 = vpop.f32.mrb[0].mxu0
    %593 = vdwg.mxu0
    %v594 = vmax.f32 %v589, 0.0
    %v595 = vld [vmem:[#allocation2 + $0x14] sm:$0xff]
    %v596 = vld [vmem:[#allocation2 + $0x1c] sm:$0xf]
    %v597 = vld [vmem:[#allocation2 + $0x4c] sm:$0xff]
    %v598 = vld [vmem:[#allocation2 + $0x54] sm:$0xf]
    %v599 = vld [vmem:[#allocation2 + $0x84] sm:$0xff]
    %v600 = vld [vmem:[#allocation2 + $0x8c] sm:$0xf]
    %v601 = vld [vmem:[#allocation2 + $0xbc] sm:$0xff]
    %v602 = vld [vmem:[#allocation2 + $0xc4] sm:$0xf]
    %v603 = vld [vmem:[#allocation2 + $0xf4] sm:$0xff]
    %v604 = vld [vmem:[#allocation2 + $0xfc] sm:$0xf]
    %v605 = vld [vmem:[#allocation2 + $0x12c] sm:$0xff]
    %v606 = vld [vmem:[#allocation2 + $0x134] sm:$0xf]
    %v607 = vld [vmem:[#allocation2 + $0x164] sm:$0xff]
    %v608 = vld [vmem:[#allocation2 + $0x16c] sm:$0xf]
    %v609 = vld [vmem:[#allocation2 + $0x19c] sm:$0xff]
    %v610 = vld [vmem:[#allocation2 + $0x1a4] sm:$0xf]
    %v611 = vld [vmem:[#allocation2 + $0x1d4] sm:$0xff]
    %v612 = vld [vmem:[#allocation2 + $0x1dc] sm:$0xf]
    %v613 = vld [vmem:[#allocation2 + $0x20c] sm:$0xff]
    %v614 = vld [vmem:[#allocation2 + $0x214] sm:$0xf]
    %v615 = vld [vmem:[#allocation2 + $0x244] sm:$0xff]
    %v616 = vld [vmem:[#allocation2 + $0x24c] sm:$0xf]
    %v617 = vld [vmem:[#allocation2 + $0x27c] sm:$0xff]
    %v618 = vld [vmem:[#allocation2 + $0x284] sm:$0xf]
    %v619 = vld [vmem:[#allocation2 + $0x2b4] sm:$0xff]
    %v620 = vld [vmem:[#allocation2 + $0x2bc] sm:$0xf]
    %v621 = vld [vmem:[#allocation2 + $0x2ec] sm:$0xff]
    %v622 = vld [vmem:[#allocation2 + $0x2f4] sm:$0xf]
    %v623 = vld [vmem:[#allocation2 + $0x324] sm:$0xff]
    %v624 = vld [vmem:[#allocation2 + $0x32c] sm:$0xf]
    %v625 = vld [vmem:[#allocation2 + $0x35c] sm:$0xff]
    %v626 = vld [vmem:[#allocation2 + $0x364] sm:$0xf]
    %v627 = vld [vmem:[%s2 + $0x5] sm:$0x7]
    %v628 = vpack.c.bf16 %v594, %v594
    %v630 = vlaneseq
    %v631 = vshrl.u32 %v630, 7
    %v632 = vsub.s32 0, %v631
    %v633 = vrot.slane %v627, %v632
    %v634 = vlaneseq
    %v635 = vshrl.u32 %v634, 7
    %v636 = vsub.s32 1, %v635
    %v637 = vrot.slane %v627, %v636
    %v638 = vlaneseq
    %v639 = vshrl.u32 %v638, 7
    %v640 = vsub.s32 2, %v639
    %v641 = vrot.slane %v627, %v640
    %v677 = vunpack.c.l.b16 %v595
    %v678 = vunpack.c.h.b16 %v595
    %v679 = vunpack.c.l.b16 %v596
    %v680 = vunpack.c.l.b16 %v597
    %v681 = vunpack.c.h.b16 %v597
    %v682 = vunpack.c.l.b16 %v598
    %v683 = vunpack.c.l.b16 %v599
    %v684 = vunpack.c.h.b16 %v599
    %v685 = vunpack.c.l.b16 %v600
    %v686 = vunpack.c.l.b16 %v601
    %v687 = vunpack.c.h.b16 %v601
    %v688 = vunpack.c.l.b16 %v602
    %v689 = vunpack.c.l.b16 %v603
    %v690 = vunpack.c.h.b16 %v603
    %v691 = vunpack.c.l.b16 %v604
    %v692 = vunpack.c.l.b16 %v605
    %v693 = vunpack.c.h.b16 %v605
    %v694 = vunpack.c.l.b16 %v606
    %v695 = vunpack.c.l.b16 %v607
    %v696 = vunpack.c.h.b16 %v607
    %v697 = vunpack.c.l.b16 %v608
    %v698 = vunpack.c.l.b16 %v609
    %v699 = vunpack.c.h.b16 %v609
    %v700 = vunpack.c.l.b16 %v610
    %v701 = vunpack.c.l.b16 %v611
    %v702 = vunpack.c.h.b16 %v611
    %v703 = vunpack.c.l.b16 %v612
    %v704 = vunpack.c.l.b16 %v613
    %v705 = vunpack.c.h.b16 %v613
    %v706 = vunpack.c.l.b16 %v614
    %v707 = vunpack.c.l.b16 %v615
    %v708 = vunpack.c.h.b16 %v615
    %v709 = vunpack.c.l.b16 %v616
    %v710 = vunpack.c.l.b16 %v617
    %v711 = vunpack.c.h.b16 %v617
    %v712 = vunpack.c.l.b16 %v618
    %v713 = vunpack.c.l.b16 %v619
    %v714 = vunpack.c.h.b16 %v619
    %v715 = vunpack.c.l.b16 %v620
    %v716 = vunpack.c.l.b16 %v621
    %v717 = vunpack.c.h.b16 %v621
    %v718 = vunpack.c.l.b16 %v622
    %v719 = vunpack.c.l.b16 %v623
    %v720 = vunpack.c.h.b16 %v623
    %v721 = vunpack.c.l.b16 %v624
    %v722 = vunpack.c.l.b16 %v625
    %v723 = vunpack.c.h.b16 %v625
    %v724 = vunpack.c.l.b16 %v626
    %v725 = vpack.c.b16 %v680, %v677
    %v726 = vpack.c.b16 %v681, %v678
    %v727 = vpack.c.b16 %v682, %v679
    %v728 = vpack.c.b16 %v686, %v683
    %v729 = vpack.c.b16 %v687, %v684
    %v730 = vpack.c.b16 %v688, %v685
    %v731 = vpack.c.b16 %v692, %v689
    %v732 = vpack.c.b16 %v693, %v690
    %v733 = vpack.c.b16 %v694, %v691
    %v734 = vpack.c.b16 %v698, %v695
    %v735 = vpack.c.b16 %v699, %v696
    %v736 = vpack.c.b16 %v700, %v697
    %v737 = vpack.c.b16 %v704, %v701
    %v738 = vpack.c.b16 %v705, %v702
    %v739 = vpack.c.b16 %v706, %v703
    %v740 = vpack.c.b16 %v710, %v707
    %v741 = vpack.c.b16 %v711, %v708
    %v742 = vpack.c.b16 %v712, %v709
    %v743 = vpack.c.b16 %v716, %v713
    %v744 = vpack.c.b16 %v717, %v714
    %v745 = vpack.c.b16 %v718, %v715
    %v746 = vpack.c.b16 %v722, %v719
    %v747 = vpack.c.b16 %v723, %v720
    %v748 = vpack.c.b16 %v724, %v721
    %773 = vmatprep.subr.bf16.mxu0 %v726
    %774 = vmatpush1.bf16.msra.mxu0 %v725
    %775 = vmatprep.subr.bf16.mxu0 %v729
    %776 = vmatpush1.bf16.msra.mxu0 %v728
    %777 = vmatprep.subr.bf16.mxu0 %v732
    %778 = vmatpush1.bf16.msra.mxu0 %v731
    %779 = vmatprep.subr.bf16.mxu0 %v735
    %780 = vmatpush1.bf16.msra.mxu0 %v734
    %781 = vmatprep.subr.bf16.mxu0 %v738
    %782 = vmatpush1.bf16.msra.mxu0 %v737
    %783 = vmatprep.subr.bf16.mxu0 %v741
    %784 = vmatpush1.bf16.msra.mxu0 %v740
    %785 = vmatprep.subr.bf16.mxu0 %v744
    %786 = vmatpush1.bf16.msra.mxu0 %v743
    %787 = vmatprep.subr.bf16.mxu0 %v747
    %788 = vmatpush1.bf16.msra.mxu0 %v746
    %789 = vmatprep.subr.bf16.mxu0 0
    %790 = vmatpush1.bf16.msra.mxu0 0
    %791 = vmatprep.subr.bf16.mxu0 0
    %792 = vmatpush1.bf16.msra.mxu0 0
    %793 = vmatprep.subr.bf16.mxu0 0
    %794 = vmatpush1.bf16.msra.mxu0 0
    %795 = vmatprep.subr.bf16.mxu0 0
    %796 = vmatpush1.bf16.msra.mxu0 0
    %797 = vmatprep.subr.bf16.mxu0 0
    %798 = vmatpush1.bf16.msra.mxu0 0
    %799 = vmatprep.subr.bf16.mxu0 0
    %800 = vmatpush1.bf16.msra.mxu0 0
    %801 = vmatprep.subr.bf16.mxu0 0
    %802 = vmatpush1.bf16.msra.mxu0 0
    %803 = vmatprep.subr.bf16.mxu0 0
    %804 = vmatpush1.bf16.msra.mxu0 0
    %805 = vmatprep.mubr.bf16.mxu0 0
    %806 = vmatmul.mubr.bf16.gmra.mrb[0].mxu0 %v628
    %v807 = vpop.f32.mrb[0].mxu0
    %v808 = vadd.f32 %v633, %v807
    %v809 = vpop.f32.mrb[0].mxu0
    %v810 = vadd.f32 %v637, %v809
    %v811 = vpop.f32.mrb[0].mxu0
    %v812 = vpop.f32.mrb[0].mxu0
    %813 = vdwg.mxu0
    %814 = vmatprep.subr.bf16.mxu0 0
    %815 = vmatpush1.bf16.msra.mxu0 %v727
    %816 = vmatprep.subr.bf16.mxu0 0
    %817 = vmatpush1.bf16.msra.mxu0 %v730
    %818 = vmatprep.subr.bf16.mxu0 0
    %819 = vmatpush1.bf16.msra.mxu0 %v733
    %820 = vmatprep.subr.bf16.mxu0 0
    %821 = vmatpush1.bf16.msra.mxu0 %v736
    %822 = vmatprep.subr.bf16.mxu0 0
    %823 = vmatpush1.bf16.msra.mxu0 %v739
    %824 = vmatprep.subr.bf16.mxu0 0
    %825 = vmatpush1.bf16.msra.mxu0 %v742
    %826 = vmatprep.subr.bf16.mxu0 0
    %827 = vmatpush1.bf16.msra.mxu0 %v745
    %828 = vmatprep.subr.bf16.mxu0 0
    %829 = vmatpush1.bf16.msra.mxu0 %v748
    %830 = vmatprep.subr.bf16.mxu0 0
    %831 = vmatpush1.bf16.msra.mxu0 0
    %832 = vmatprep.subr.bf16.mxu0 0
    %833 = vmatpush1.bf16.msra.mxu0 0
    %834 = vmatprep.subr.bf16.mxu0 0
    %835 = vmatpush1.bf16.msra.mxu0 0
    %836 = vmatprep.subr.bf16.mxu0 0
    %837 = vmatpush1.bf16.msra.mxu0 0
    %838 = vmatprep.subr.bf16.mxu0 0
    %839 = vmatpush1.bf16.msra.mxu0 0
    %840 = vmatprep.subr.bf16.mxu0 0
    %841 = vmatpush1.bf16.msra.mxu0 0
    %842 = vmatprep.subr.bf16.mxu0 0
    %843 = vmatpush1.bf16.msra.mxu0 0
    %844 = vmatprep.subr.bf16.mxu0 0
    %845 = vmatpush1.bf16.msra.mxu0 0
    %846 = vmatprep.mubr.bf16.mxu0 0
    %847 = vmatmul.mubr.bf16.gmra.mrb[0].mxu0 %v628
    %v848 = vpop.f32.mrb[0].mxu0
    %v849 = vadd.f32 %v641, %v848
    %v850 = vpop.f32.mrb[0].mxu0
    %v851 = vpop.f32.mrb[0].mxu0
    %v852 = vpop.f32.mrb[0].mxu0
    %853 = vdwg.mxu0
    %v854 = vmax.f32 %v810, -5.0
    %v855 = vmin.f32 %v854, 5.0
    %v856 = vmax.f32 %v849, 0.0
    %v857 = vmul.f32 %v855, 0.5
    %v858 = vmul.f32 %v857, 1.442695
    %v859 = vpow.pop %v858
    %v861 = vrot.slane %v29, 2
    %v863 = vmul.f32 %v861, %v859
    %v864 = vadd.f32 %v808, %v863
    %v865 = vld [vmem:[#allocation2 + $0x20] sm:$0xf]
    %v866 = vld [vmem:[#allocation2 + $0x58] sm:$0xf]
    %v867 = vld [vmem:[#allocation2 + $0x90] sm:$0xf]
    %v868 = vld [vmem:[#allocation2 + $0xc8] sm:$0xf]
    %v869 = vld [vmem:[#allocation2 + $0x100] sm:$0xf]
    %v870 = vld [vmem:[#allocation2 + $0x138] sm:$0xf]
    %v871 = vld [vmem:[#allocation2 + $0x170] sm:$0xf]
    %v872 = vld [vmem:[#allocation2 + $0x1a8] sm:$0xf]
    %v873 = vld [vmem:[#allocation2 + $0x1e0] sm:$0xf]
    %v874 = vld [vmem:[#allocation2 + $0x218] sm:$0xf]
    %v875 = vld [vmem:[#allocation2 + $0x250] sm:$0xf]
    %v876 = vld [vmem:[#allocation2 + $0x288] sm:$0xf]
    %v877 = vld [vmem:[#allocation2 + $0x2c0] sm:$0xf]
    %v878 = vld [vmem:[#allocation2 + $0x2f8] sm:$0xf]
    %v879 = vld [vmem:[#allocation2 + $0x330] sm:$0xf]
    %v880 = vld [vmem:[#allocation2 + $0x368] sm:$0xf]
    %v881 = vld [vmem:[%s2 + $0x8] sm:$0x1]
    %v882 = vpack.c.bf16 %v864, %v864
    %v884 = vlaneseq
    %v885 = vshrl.u32 %v884, 7
    %v886 = vsub.s32 0, %v885
    %v887 = vrot.slane %v881, %v886
    %v905 = vunpack.c.l.b16 %v865
    %v906 = vunpack.c.l.b16 %v866
    %v907 = vunpack.c.l.b16 %v867
    %v908 = vunpack.c.l.b16 %v868
    %v909 = vunpack.c.l.b16 %v869
    %v910 = vunpack.c.l.b16 %v870
    %v911 = vunpack.c.l.b16 %v871
    %v912 = vunpack.c.l.b16 %v872
    %v913 = vunpack.c.l.b16 %v873
    %v914 = vunpack.c.l.b16 %v874
    %v915 = vunpack.c.l.b16 %v875
    %v916 = vunpack.c.l.b16 %v876
    %v917 = vunpack.c.l.b16 %v877
    %v918 = vunpack.c.l.b16 %v878
    %v919 = vunpack.c.l.b16 %v879
    %v920 = vunpack.c.l.b16 %v880
    %v921 = vpack.c.b16 %v906, %v905
    %v922 = vpack.c.b16 %v908, %v907
    %v923 = vpack.c.b16 %v910, %v909
    %v924 = vpack.c.b16 %v912, %v911
    %v925 = vpack.c.b16 %v914, %v913
    %v926 = vpack.c.b16 %v916, %v915
    %v927 = vpack.c.b16 %v918, %v917
    %v928 = vpack.c.b16 %v920, %v919
    %937 = vmatprep.subr.bf16.mxu0 0
    %938 = vmatpush1.bf16.msra.mxu0 %v921
    %939 = vmatprep.subr.bf16.mxu0 0
    %940 = vmatpush1.bf16.msra.mxu0 %v922
    %941 = vmatprep.subr.bf16.mxu0 0
    %942 = vmatpush1.bf16.msra.mxu0 %v923
    %943 = vmatprep.subr.bf16.mxu0 0
    %944 = vmatpush1.bf16.msra.mxu0 %v924
    %945 = vmatprep.subr.bf16.mxu0 0
    %946 = vmatpush1.bf16.msra.mxu0 %v925
    %947 = vmatprep.subr.bf16.mxu0 0
    %948 = vmatpush1.bf16.msra.mxu0 %v926
    %949 = vmatprep.subr.bf16.mxu0 0
    %950 = vmatpush1.bf16.msra.mxu0 %v927
    %951 = vmatprep.subr.bf16.mxu0 0
    %952 = vmatpush1.bf16.msra.mxu0 %v928
    %953 = vmatprep.subr.bf16.mxu0 0
    %954 = vmatpush1.bf16.msra.mxu0 0
    %955 = vmatprep.subr.bf16.mxu0 0
    %956 = vmatpush1.bf16.msra.mxu0 0
    %957 = vmatprep.subr.bf16.mxu0 0
    %958 = vmatpush1.bf16.msra.mxu0 0
    %959 = vmatprep.subr.bf16.mxu0 0
    %960 = vmatpush1.bf16.msra.mxu0 0
    %961 = vmatprep.subr.bf16.mxu0 0
    %962 = vmatpush1.bf16.msra.mxu0 0
    %963 = vmatprep.subr.bf16.mxu0 0
    %964 = vmatpush1.bf16.msra.mxu0 0
    %965 = vmatprep.subr.bf16.mxu0 0
    %966 = vmatpush1.bf16.msra.mxu0 0
    %967 = vmatprep.subr.bf16.mxu0 0
    %968 = vmatpush1.bf16.msra.mxu0 0
    %969 = vmatprep.mubr.bf16.mxu0 0
    %970 = vmatmul.mubr.bf16.gmra.mrb[0].mxu0 %v882
    %v971 = vpop.f32.mrb[0].mxu0
    %v972 = vadd.f32 %v887, %v971
    %v973 = vpop.f32.mrb[0].mxu0
    %v974 = vpop.f32.mrb[0].mxu0
    %v975 = vpop.f32.mrb[0].mxu0
    %976 = vdwg.mxu0
    %v977 = vmax.f32 %v972, 0.0
    %v978 = vld [vmem:[#allocation2 + $0x24] sm:$0xf]
    %v979 = vld [vmem:[#allocation2 + $0x5c] sm:$0xf]
    %v980 = vld [vmem:[#allocation2 + $0x94] sm:$0xf]
    %v981 = vld [vmem:[#allocation2 + $0xcc] sm:$0xf]
    %v982 = vld [vmem:[#allocation2 + $0x104] sm:$0xf]
    %v983 = vld [vmem:[#allocation2 + $0x13c] sm:$0xf]
    %v984 = vld [vmem:[#allocation2 + $0x174] sm:$0xf]
    %v985 = vld [vmem:[#allocation2 + $0x1ac] sm:$0xf]
    %v986 = vld [vmem:[#allocation2 + $0x1e4] sm:$0xf]
    %v987 = vld [vmem:[#allocation2 + $0x21c] sm:$0xf]
    %v988 = vld [vmem:[#allocation2 + $0x254] sm:$0xf]
    %v989 = vld [vmem:[#allocation2 + $0x28c] sm:$0xf]
    %v990 = vld [vmem:[#allocation2 + $0x2c4] sm:$0xf]
    %v991 = vld [vmem:[#allocation2 + $0x2fc] sm:$0xf]
    %v992 = vld [vmem:[#allocation2 + $0x334] sm:$0xf]
    %v993 = vld [vmem:[#allocation2 + $0x36c] sm:$0xf]
    %v994 = vld [vmem:[%s2 + $0x9] sm:$0x1]
    %v995 = vpack.c.bf16 %v977, %v977
    %v997 = vlaneseq
    %v998 = vshrl.u32 %v997, 7
    %v999 = vsub.s32 0, %v998
    %v1000 = vrot.slane %v994, %v999
    %v1018 = vunpack.c.l.b16 %v978
    %v1019 = vunpack.c.l.b16 %v979
    %v1020 = vunpack.c.l.b16 %v980
    %v1021 = vunpack.c.l.b16 %v981
    %v1022 = vunpack.c.l.b16 %v982
    %v1023 = vunpack.c.l.b16 %v983
    %v1024 = vunpack.c.l.b16 %v984
    %v1025 = vunpack.c.l.b16 %v985
    %v1026 = vunpack.c.l.b16 %v986
    %v1027 = vunpack.c.l.b16 %v987
    %v1028 = vunpack.c.l.b16 %v988
    %v1029 = vunpack.c.l.b16 %v989
    %v1030 = vunpack.c.l.b16 %v990
    %v1031 = vunpack.c.l.b16 %v991
    %v1032 = vunpack.c.l.b16 %v992
    %v1033 = vunpack.c.l.b16 %v993
    %v1034 = vpack.c.b16 %v1019, %v1018
    %v1035 = vpack.c.b16 %v1021, %v1020
    %v1036 = vpack.c.b16 %v1023, %v1022
    %v1037 = vpack.c.b16 %v1025, %v1024
    %v1038 = vpack.c.b16 %v1027, %v1026
    %v1039 = vpack.c.b16 %v1029, %v1028
    %v1040 = vpack.c.b16 %v1031, %v1030
    %v1041 = vpack.c.b16 %v1033, %v1032
    %1050 = vmatprep.subr.bf16.mxu0 0
    %1051 = vmatpush1.bf16.msra.mxu0 %v1034
    %1052 = vmatprep.subr.bf16.mxu0 0
    %1053 = vmatpush1.bf16.msra.mxu0 %v1035
    %1054 = vmatprep.subr.bf16.mxu0 0
    %1055 = vmatpush1.bf16.msra.mxu0 %v1036
    %1056 = vmatprep.subr.bf16.mxu0 0
    %1057 = vmatpush1.bf16.msra.mxu0 %v1037
    %1058 = vmatprep.subr.bf16.mxu0 0
    %1059 = vmatpush1.bf16.msra.mxu0 %v1038
    %1060 = vmatprep.subr.bf16.mxu0 0
    %1061 = vmatpush1.bf16.msra.mxu0 %v1039
    %1062 = vmatprep.subr.bf16.mxu0 0
    %1063 = vmatpush1.bf16.msra.mxu0 %v1040
    %1064 = vmatprep.subr.bf16.mxu0 0
    %1065 = vmatpush1.bf16.msra.mxu0 %v1041
    %1066 = vmatprep.subr.bf16.mxu0 0
    %1067 = vmatpush1.bf16.msra.mxu0 0
    %1068 = vmatprep.subr.bf16.mxu0 0
    %1069 = vmatpush1.bf16.msra.mxu0 0
    %1070 = vmatprep.subr.bf16.mxu0 0
    %1071 = vmatpush1.bf16.msra.mxu0 0
    %1072 = vmatprep.subr.bf16.mxu0 0
    %1073 = vmatpush1.bf16.msra.mxu0 0
    %1074 = vmatprep.subr.bf16.mxu0 0
    %1075 = vmatpush1.bf16.msra.mxu0 0
    %1076 = vmatprep.subr.bf16.mxu0 0
    %1077 = vmatpush1.bf16.msra.mxu0 0
    %1078 = vmatprep.subr.bf16.mxu0 0
    %1079 = vmatpush1.bf16.msra.mxu0 0
    %1080 = vmatprep.subr.bf16.mxu0 0
    %1081 = vmatpush1.bf16.msra.mxu0 0
    %1082 = vmatprep.mubr.bf16.mxu0 0
    %1083 = vmatmul.mubr.bf16.gmra.mrb[0].mxu0 %v995
    %v1084 = vpop.f32.mrb[0].mxu0
    %v1085 = vadd.f32 %v1000, %v1084
    %v1086 = vpop.f32.mrb[0].mxu0
    %v1087 = vpop.f32.mrb[0].mxu0
    %v1088 = vpop.f32.mrb[0].mxu0
    %1089 = vdwg.mxu0
    %v1090 = vmax.f32 %v1085, 0.0
    %v1091 = vld [vmem:[#allocation2 + $0x28] sm:$0xf]
    %v1092 = vld [vmem:[#allocation2 + $0x60] sm:$0xf]
    %v1093 = vld [vmem:[#allocation2 + $0x98] sm:$0xf]
    %v1094 = vld [vmem:[#allocation2 + $0xd0] sm:$0xf]
    %v1095 = vld [vmem:[#allocation2 + $0x108] sm:$0xf]
    %v1096 = vld [vmem:[#allocation2 + $0x140] sm:$0xf]
    %v1097 = vld [vmem:[#allocation2 + $0x178] sm:$0xf]
    %v1098 = vld [vmem:[#allocation2 + $0x1b0] sm:$0xf]
    %v1099 = vld [vmem:[#allocation2 + $0x1e8] sm:$0xf]
    %v1100 = vld [vmem:[#allocation2 + $0x220] sm:$0xf]
    %v1101 = vld [vmem:[#allocation2 + $0x258] sm:$0xf]
    %v1102 = vld [vmem:[#allocation2 + $0x290] sm:$0xf]
    %v1103 = vld [vmem:[#allocation2 + $0x2c8] sm:$0xf]
    %v1104 = vld [vmem:[#allocation2 + $0x300] sm:$0xf]
    %v1105 = vld [vmem:[#allocation2 + $0x338] sm:$0xf]
    %v1106 = vld [vmem:[#allocation2 + $0x370] sm:$0xf]
    %v1107 = vld [vmem:[%s2 + $0xa] sm:$0x1]
    %v1108 = vpack.c.bf16 %v1090, %v1090
    %v1110 = vlaneseq
    %v1111 = vshrl.u32 %v1110, 7
    %v1112 = vsub.s32 0, %v1111
    %v1113 = vrot.slane %v1107, %v1112
    %v1131 = vunpack.c.l.b16 %v1091
    %v1132 = vunpack.c.l.b16 %v1092
    %v1133 = vunpack.c.l.b16 %v1093
    %v1134 = vunpack.c.l.b16 %v1094
    %v1135 = vunpack.c.l.b16 %v1095
    %v1136 = vunpack.c.l.b16 %v1096
    %v1137 = vunpack.c.l.b16 %v1097
    %v1138 = vunpack.c.l.b16 %v1098
    %v1139 = vunpack.c.l.b16 %v1099
    %v1140 = vunpack.c.l.b16 %v1100
    %v1141 = vunpack.c.l.b16 %v1101
    %v1142 = vunpack.c.l.b16 %v1102
    %v1143 = vunpack.c.l.b16 %v1103
    %v1144 = vunpack.c.l.b16 %v1104
    %v1145 = vunpack.c.l.b16 %v1105
    %v1146 = vunpack.c.l.b16 %v1106
    %v1147 = vpack.c.b16 %v1132, %v1131
    %v1148 = vpack.c.b16 %v1134, %v1133
    %v1149 = vpack.c.b16 %v1136, %v1135
    %v1150 = vpack.c.b16 %v1138, %v1137
    %v1151 = vpack.c.b16 %v1140, %v1139
    %v1152 = vpack.c.b16 %v1142, %v1141
    %v1153 = vpack.c.b16 %v1144, %v1143
    %v1154 = vpack.c.b16 %v1146, %v1145
    %1163 = vmatprep.subr.bf16.mxu0 0
    %1164 = vmatpush1.bf16.msra.mxu0 %v1147
    %1165 = vmatprep.subr.bf16.mxu0 0
    %1166 = vmatpush1.bf16.msra.mxu0 %v1148
    %1167 = vmatprep.subr.bf16.mxu0 0
    %1168 = vmatpush1.bf16.msra.mxu0 %v1149
    %1169 = vmatprep.subr.bf16.mxu0 0
    %1170 = vmatpush1.bf16.msra.mxu0 %v1150
    %1171 = vmatprep.subr.bf16.mxu0 0
    %1172 = vmatpush1.bf16.msra.mxu0 %v1151
    %1173 = vmatprep.subr.bf16.mxu0 0
    %1174 = vmatpush1.bf16.msra.mxu0 %v1152
    %1175 = vmatprep.subr.bf16.mxu0 0
    %1176 = vmatpush1.bf16.msra.mxu0 %v1153
    %1177 = vmatprep.subr.bf16.mxu0 0
    %1178 = vmatpush1.bf16.msra.mxu0 %v1154
    %1179 = vmatprep.subr.bf16.mxu0 0
    %1180 = vmatpush1.bf16.msra.mxu0 0
    %1181 = vmatprep.subr.bf16.mxu0 0
    %1182 = vmatpush1.bf16.msra.mxu0 0
    %1183 = vmatprep.subr.bf16.mxu0 0
    %1184 = vmatpush1.bf16.msra.mxu0 0
    %1185 = vmatprep.subr.bf16.mxu0 0
    %1186 = vmatpush1.bf16.msra.mxu0 0
    %1187 = vmatprep.subr.bf16.mxu0 0
    %1188 = vmatpush1.bf16.msra.mxu0 0
    %1189 = vmatprep.subr.bf16.mxu0 0
    %1190 = vmatpush1.bf16.msra.mxu0 0
    %1191 = vmatprep.subr.bf16.mxu0 0
    %1192 = vmatpush1.bf16.msra.mxu0 0
    %1193 = vmatprep.subr.bf16.mxu0 0
    %1194 = vmatpush1.bf16.msra.mxu0 0
    %1195 = vmatprep.mubr.bf16.mxu0 0
    %1196 = vmatmul.mubr.bf16.gmra.mrb[0].mxu0 %v1108
    %v1197 = vpop.f32.mrb[0].mxu0
    %v1198 = vadd.f32 %v1113, %v1197
    %v1199 = vpop.f32.mrb[0].mxu0
    %v1200 = vpop.f32.mrb[0].mxu0
    %v1201 = vpop.f32.mrb[0].mxu0
    %1202 = vdwg.mxu0
    %v1203 = vmax.f32 %v1198, 0.0
    %v1204 = vld [vmem:[#allocation2 + $0x2c] sm:$0xf]
    %v1205 = vld [vmem:[#allocation2 + $0x64] sm:$0xf]
    %v1206 = vld [vmem:[#allocation2 + $0x9c] sm:$0xf]
    %v1207 = vld [vmem:[#allocation2 + $0xd4] sm:$0xf]
    %v1208 = vld [vmem:[#allocation2 + $0x10c] sm:$0xf]
    %v1209 = vld [vmem:[#allocation2 + $0x144] sm:$0xf]
    %v1210 = vld [vmem:[#allocation2 + $0x17c] sm:$0xf]
    %v1211 = vld [vmem:[#allocation2 + $0x1b4] sm:$0xf]
    %v1212 = vld [vmem:[#allocation2 + $0x1ec] sm:$0xf]
    %v1213 = vld [vmem:[#allocation2 + $0x224] sm:$0xf]
    %v1214 = vld [vmem:[#allocation2 + $0x25c] sm:$0xf]
    %v1215 = vld [vmem:[#allocation2 + $0x294] sm:$0xf]
    %v1216 = vld [vmem:[#allocation2 + $0x2cc] sm:$0xf]
    %v1217 = vld [vmem:[#allocation2 + $0x304] sm:$0xf]
    %v1218 = vld [vmem:[#allocation2 + $0x33c] sm:$0xf]
    %v1219 = vld [vmem:[#allocation2 + $0x374] sm:$0xf]
    %v1220 = vld [vmem:[%s2 + $0xb] sm:$0x1]
    %v1221 = vpack.c.bf16 %v1203, %v1203
    %v1223 = vlaneseq
    %v1224 = vshrl.u32 %v1223, 7
    %v1225 = vsub.s32 0, %v1224
    %v1226 = vrot.slane %v1220, %v1225
    %v1244 = vunpack.c.l.b16 %v1204
    %v1245 = vunpack.c.l.b16 %v1205
    %v1246 = vunpack.c.l.b16 %v1206
    %v1247 = vunpack.c.l.b16 %v1207
    %v1248 = vunpack.c.l.b16 %v1208
    %v1249 = vunpack.c.l.b16 %v1209
    %v1250 = vunpack.c.l.b16 %v1210
    %v1251 = vunpack.c.l.b16 %v1211
    %v1252 = vunpack.c.l.b16 %v1212
    %v1253 = vunpack.c.l.b16 %v1213
    %v1254 = vunpack.c.l.b16 %v1214
    %v1255 = vunpack.c.l.b16 %v1215
    %v1256 = vunpack.c.l.b16 %v1216
    %v1257 = vunpack.c.l.b16 %v1217
    %v1258 = vunpack.c.l.b16 %v1218
    %v1259 = vunpack.c.l.b16 %v1219
    %v1260 = vpack.c.b16 %v1245, %v1244
    %v1261 = vpack.c.b16 %v1247, %v1246
    %v1262 = vpack.c.b16 %v1249, %v1248
    %v1263 = vpack.c.b16 %v1251, %v1250
    %v1264 = vpack.c.b16 %v1253, %v1252
    %v1265 = vpack.c.b16 %v1255, %v1254
    %v1266 = vpack.c.b16 %v1257, %v1256
    %v1267 = vpack.c.b16 %v1259, %v1258
    %1276 = vmatprep.subr.bf16.mxu0 0
    %1277 = vmatpush1.bf16.msra.mxu0 %v1260
    %1278 = vmatprep.subr.bf16.mxu0 0
    %1279 = vmatpush1.bf16.msra.mxu0 %v1261
    %1280 = vmatprep.subr.bf16.mxu0 0
    %1281 = vmatpush1.bf16.msra.mxu0 %v1262
    %1282 = vmatprep.subr.bf16.mxu0 0
    %1283 = vmatpush1.bf16.msra.mxu0 %v1263
    %1284 = vmatprep.subr.bf16.mxu0 0
    %1285 = vmatpush1.bf16.msra.mxu0 %v1264
    %1286 = vmatprep.subr.bf16.mxu0 0
    %1287 = vmatpush1.bf16.msra.mxu0 %v1265
    %1288 = vmatprep.subr.bf16.mxu0 0
    %1289 = vmatpush1.bf16.msra.mxu0 %v1266
    %1290 = vmatprep.subr.bf16.mxu0 0
    %1291 = vmatpush1.bf16.msra.mxu0 %v1267
    %1292 = vmatprep.subr.bf16.mxu0 0
    %1293 = vmatpush1.bf16.msra.mxu0 0
    %1294 = vmatprep.subr.bf16.mxu0 0
    %1295 = vmatpush1.bf16.msra.mxu0 0
    %1296 = vmatprep.subr.bf16.mxu0 0
    %1297 = vmatpush1.bf16.msra.mxu0 0
    %1298 = vmatprep.subr.bf16.mxu0 0
    %1299 = vmatpush1.bf16.msra.mxu0 0
    %1300 = vmatprep.subr.bf16.mxu0 0
    %1301 = vmatpush1.bf16.msra.mxu0 0
    %1302 = vmatprep.subr.bf16.mxu0 0
    %1303 = vmatpush1.bf16.msra.mxu0 0
    %1304 = vmatprep.subr.bf16.mxu0 0
    %1305 = vmatpush1.bf16.msra.mxu0 0
    %1306 = vmatprep.subr.bf16.mxu0 0
    %1307 = vmatpush1.bf16.msra.mxu0 0
    %1308 = vmatprep.mubr.bf16.mxu0 0
    %1309 = vmatmul.mubr.bf16.gmra.mrb[0].mxu0 %v1221
    %v1310 = vpop.f32.mrb[0].mxu0
    %v1311 = vadd.f32 %v1226, %v1310
    %v1312 = vpop.f32.mrb[0].mxu0
    %v1313 = vpop.f32.mrb[0].mxu0
    %v1314 = vpop.f32.mrb[0].mxu0
    %1315 = vdwg.mxu0
    %v1316 = vmax.f32 %v1311, 0.0
    %v1317 = vld [vmem:[#allocation2 + $0x30] sm:$0xf]
    %v1318 = vld [vmem:[#allocation2 + $0x68] sm:$0xf]
    %v1319 = vld [vmem:[#allocation2 + $0xa0] sm:$0xf]
    %v1320 = vld [vmem:[#allocation2 + $0xd8] sm:$0xf]
    %v1321 = vld [vmem:[#allocation2 + $0x110] sm:$0xf]
    %v1322 = vld [vmem:[#allocation2 + $0x148] sm:$0xf]
    %v1323 = vld [vmem:[#allocation2 + $0x180] sm:$0xf]
    %v1324 = vld [vmem:[#allocation2 + $0x1b8] sm:$0xf]
    %v1325 = vld [vmem:[#allocation2 + $0x1f0] sm:$0xf]
    %v1326 = vld [vmem:[#allocation2 + $0x228] sm:$0xf]
    %v1327 = vld [vmem:[#allocation2 + $0x260] sm:$0xf]
    %v1328 = vld [vmem:[#allocation2 + $0x298] sm:$0xf]
    %v1329 = vld [vmem:[#allocation2 + $0x2d0] sm:$0xf]
    %v1330 = vld [vmem:[#allocation2 + $0x308] sm:$0xf]
    %v1331 = vld [vmem:[#allocation2 + $0x340] sm:$0xf]
    %v1332 = vld [vmem:[#allocation2 + $0x378] sm:$0xf]
    %v1333 = vld [vmem:[%s2 + $0xc] sm:$0x1]
    %v1334 = vpack.c.bf16 %v1316, %v1316
    %v1336 = vlaneseq
    %v1337 = vshrl.u32 %v1336, 7
    %v1338 = vsub.s32 0, %v1337
    %v1339 = vrot.slane %v1333, %v1338
    %v1357 = vunpack.c.l.b16 %v1317
    %v1358 = vunpack.c.l.b16 %v1318
    %v1359 = vunpack.c.l.b16 %v1319
    %v1360 = vunpack.c.l.b16 %v1320
    %v1361 = vunpack.c.l.b16 %v1321
    %v1362 = vunpack.c.l.b16 %v1322
    %v1363 = vunpack.c.l.b16 %v1323
    %v1364 = vunpack.c.l.b16 %v1324
    %v1365 = vunpack.c.l.b16 %v1325
    %v1366 = vunpack.c.l.b16 %v1326
    %v1367 = vunpack.c.l.b16 %v1327
    %v1368 = vunpack.c.l.b16 %v1328
    %v1369 = vunpack.c.l.b16 %v1329
    %v1370 = vunpack.c.l.b16 %v1330
    %v1371 = vunpack.c.l.b16 %v1331
    %v1372 = vunpack.c.l.b16 %v1332
    %v1373 = vpack.c.b16 %v1358, %v1357
    %v1374 = vpack.c.b16 %v1360, %v1359
    %v1375 = vpack.c.b16 %v1362, %v1361
    %v1376 = vpack.c.b16 %v1364, %v1363
    %v1377 = vpack.c.b16 %v1366, %v1365
    %v1378 = vpack.c.b16 %v1368, %v1367
    %v1379 = vpack.c.b16 %v1370, %v1369
    %v1380 = vpack.c.b16 %v1372, %v1371
    %1389 = vmatprep.subr.bf16.mxu0 0
    %1390 = vmatpush1.bf16.msra.mxu0 %v1373
    %1391 = vmatprep.subr.bf16.mxu0 0
    %1392 = vmatpush1.bf16.msra.mxu0 %v1374
    %1393 = vmatprep.subr.bf16.mxu0 0
    %1394 = vmatpush1.bf16.msra.mxu0 %v1375
    %1395 = vmatprep.subr.bf16.mxu0 0
    %1396 = vmatpush1.bf16.msra.mxu0 %v1376
    %1397 = vmatprep.subr.bf16.mxu0 0
    %1398 = vmatpush1.bf16.msra.mxu0 %v1377
    %1399 = vmatprep.subr.bf16.mxu0 0
    %1400 = vmatpush1.bf16.msra.mxu0 %v1378
    %1401 = vmatprep.subr.bf16.mxu0 0
    %1402 = vmatpush1.bf16.msra.mxu0 %v1379
    %1403 = vmatprep.subr.bf16.mxu0 0
    %1404 = vmatpush1.bf16.msra.mxu0 %v1380
    %1405 = vmatprep.subr.bf16.mxu0 0
    %1406 = vmatpush1.bf16.msra.mxu0 0
    %1407 = vmatprep.subr.bf16.mxu0 0
    %1408 = vmatpush1.bf16.msra.mxu0 0
    %1409 = vmatprep.subr.bf16.mxu0 0
    %1410 = vmatpush1.bf16.msra.mxu0 0
    %1411 = vmatprep.subr.bf16.mxu0 0
    %1412 = vmatpush1.bf16.msra.mxu0 0
    %1413 = vmatprep.subr.bf16.mxu0 0
    %1414 = vmatpush1.bf16.msra.mxu0 0
    %1415 = vmatprep.subr.bf16.mxu0 0
    %1416 = vmatpush1.bf16.msra.mxu0 0
    %1417 = vmatprep.subr.bf16.mxu0 0
    %1418 = vmatpush1.bf16.msra.mxu0 0
    %1419 = vmatprep.subr.bf16.mxu0 0
    %1420 = vmatpush1.bf16.msra.mxu0 0
    %1421 = vmatprep.mubr.bf16.mxu0 0
    %1422 = vmatmul.mubr.bf16.gmra.mrb[0].mxu0 %v1334
    %v1423 = vpop.f32.mrb[0].mxu0
    %v1424 = vadd.f32 %v1339, %v1423
    %v1425 = vpop.f32.mrb[0].mxu0
    %v1426 = vpop.f32.mrb[0].mxu0
    %v1427 = vpop.f32.mrb[0].mxu0
    %1428 = vdwg.mxu0
    %v1429 = vld [vmem:[#allocation2 + $0x34] sm:$0xf]
    %v1430 = vld [vmem:[#allocation2 + $0x6c] sm:$0xf]
    %v1431 = vld [vmem:[#allocation2 + $0xa4] sm:$0xf]
    %v1432 = vld [vmem:[#allocation2 + $0xdc] sm:$0xf]
    %v1433 = vld [vmem:[#allocation2 + $0x114] sm:$0xf]
    %v1434 = vld [vmem:[#allocation2 + $0x14c] sm:$0xf]
    %v1435 = vld [vmem:[#allocation2 + $0x184] sm:$0xf]
    %v1436 = vld [vmem:[#allocation2 + $0x1bc] sm:$0xf]
    %v1437 = vld [vmem:[#allocation2 + $0x1f4] sm:$0xf]
    %v1438 = vld [vmem:[#allocation2 + $0x22c] sm:$0xf]
    %v1439 = vld [vmem:[#allocation2 + $0x264] sm:$0xf]
    %v1440 = vld [vmem:[#allocation2 + $0x29c] sm:$0xf]
    %v1441 = vld [vmem:[#allocation2 + $0x2d4] sm:$0xf]
    %v1442 = vld [vmem:[#allocation2 + $0x30c] sm:$0xf]
    %v1443 = vld [vmem:[#allocation2 + $0x344] sm:$0xf]
    %v1444 = vld [vmem:[#allocation2 + $0x37c] sm:$0xf]
    %v1445 = vld [vmem:[%s2 + $0xd] sm:$0x1]
    %v1446 = vpack.c.bf16 %v856, %v856
    %v1448 = vlaneseq
    %v1449 = vshrl.u32 %v1448, 7
    %v1450 = vsub.s32 0, %v1449
    %v1451 = vrot.slane %v1445, %v1450
    %v1469 = vunpack.c.l.b16 %v1429
    %v1470 = vunpack.c.l.b16 %v1430
    %v1471 = vunpack.c.l.b16 %v1431
    %v1472 = vunpack.c.l.b16 %v1432
    %v1473 = vunpack.c.l.b16 %v1433
    %v1474 = vunpack.c.l.b16 %v1434
    %v1475 = vunpack.c.l.b16 %v1435
    %v1476 = vunpack.c.l.b16 %v1436
    %v1477 = vunpack.c.l.b16 %v1437
    %v1478 = vunpack.c.l.b16 %v1438
    %v1479 = vunpack.c.l.b16 %v1439
    %v1480 = vunpack.c.l.b16 %v1440
    %v1481 = vunpack.c.l.b16 %v1441
    %v1482 = vunpack.c.l.b16 %v1442
    %v1483 = vunpack.c.l.b16 %v1443
    %v1484 = vunpack.c.l.b16 %v1444
    %v1485 = vpack.c.b16 %v1470, %v1469
    %v1486 = vpack.c.b16 %v1472, %v1471
    %v1487 = vpack.c.b16 %v1474, %v1473
    %v1488 = vpack.c.b16 %v1476, %v1475
    %v1489 = vpack.c.b16 %v1478, %v1477
    %v1490 = vpack.c.b16 %v1480, %v1479
    %v1491 = vpack.c.b16 %v1482, %v1481
    %v1492 = vpack.c.b16 %v1484, %v1483
    %1501 = vmatprep.subr.bf16.mxu0 0
    %1502 = vmatpush1.bf16.msra.mxu0 %v1485
    %1503 = vmatprep.subr.bf16.mxu0 0
    %1504 = vmatpush1.bf16.msra.mxu0 %v1486
    %1505 = vmatprep.subr.bf16.mxu0 0
    %1506 = vmatpush1.bf16.msra.mxu0 %v1487
    %1507 = vmatprep.subr.bf16.mxu0 0
    %1508 = vmatpush1.bf16.msra.mxu0 %v1488
    %1509 = vmatprep.subr.bf16.mxu0 0
    %1510 = vmatpush1.bf16.msra.mxu0 %v1489
    %1511 = vmatprep.subr.bf16.mxu0 0
    %1512 = vmatpush1.bf16.msra.mxu0 %v1490
    %1513 = vmatprep.subr.bf16.mxu0 0
    %1514 = vmatpush1.bf16.msra.mxu0 %v1491
    %1515 = vmatprep.subr.bf16.mxu0 0
    %1516 = vmatpush1.bf16.msra.mxu0 %v1492
    %1517 = vmatprep.subr.bf16.mxu0 0
    %1518 = vmatpush1.bf16.msra.mxu0 0
    %1519 = vmatprep.subr.bf16.mxu0 0
    %1520 = vmatpush1.bf16.msra.mxu0 0
    %1521 = vmatprep.subr.bf16.mxu0 0
    %1522 = vmatpush1.bf16.msra.mxu0 0
    %1523 = vmatprep.subr.bf16.mxu0 0
    %1524 = vmatpush1.bf16.msra.mxu0 0
    %1525 = vmatprep.subr.bf16.mxu0 0
    %1526 = vmatpush1.bf16.msra.mxu0 0
    %1527 = vmatprep.subr.bf16.mxu0 0
    %1528 = vmatpush1.bf16.msra.mxu0 0
    %1529 = vmatprep.subr.bf16.mxu0 0
    %1530 = vmatpush1.bf16.msra.mxu0 0
    %1531 = vmatprep.subr.bf16.mxu0 0
    %1532 = vmatpush1.bf16.msra.mxu0 0
    %1533 = vmatprep.mubr.bf16.mxu0 0
    %1534 = vmatmul.mubr.bf16.gmra.mrb[0].mxu0 %v1446
    %v1535 = vpop.f32.mrb[0].mxu0
    %v1536 = vadd.f32 %v1451, %v1535
    %v1537 = vpop.f32.mrb[0].mxu0
    %v1538 = vpop.f32.mrb[0].mxu0
    %v1539 = vpop.f32.mrb[0].mxu0
    %1540 = vdwg.mxu0
    %1541 = vst [vmem:[%s3] sm:$0x3] %v594
    %1542 = vst [vmem:[%s3 + $0x2] sm:$0x3] %v1424
    %1543 = vst [vmem:[%s3 + $0x4] sm:$0x3] %v808
    %1544 = vst [vmem:[%s3 + $0x6] sm:$0x3] %v855
    %1545 = vst [vmem:[%s3 + $0x8] sm:$0x3] %v1536
    // Predicated region
    $region18: #{forward.1} parent=1 // pred_check
      _
    $region19: #{forward.1} parent=1 // pred_check_branch
      %1547 = sbr.rel (0) target = $region21
    $region20: #{forward.1} parent=1 // pred_region
      _
    $region21: #{forward.1} parent=1 // pred_fallthru
      _
    // Predicated region
    $region22: #{forward.1} parent=1 // pred_check
      _
    $region23: #{forward.1} parent=1 // pred_check_branch
      %1549 = sbr.rel (0) target = $region25
    $region24: #{forward.1} parent=1 // pred_region
      _
    $region25: #{forward.1} parent=1 // pred_fallthru
      _
    %1550 = vsyncpa [#allocation3], 1

</llo_original>
